<compile_context>
chip_gen: v7x
topology: tpu7x:2x2x1
jax: 0.10.0
libtpu: 0.0.40
codegen_flags: <defaults>
</compile_context>

<pallas_src>
import functools

import jax
import jax.numpy as jnp
from jax.experimental import pallas as pl
from jax.experimental.pallas import tpu as pltpu

LANES = 128        # TPU vreg lane width; outputs are padded to this for lane-dense stores
NEG_INF = -1e30    # large negative logit for padded softmax columns (exp -> exactly 0)


# ---------------------------------------------------------------------------
# Fused kernel: embedding gather -> N transformer layers -> linear -> softmax
# ---------------------------------------------------------------------------
def _fused_forward_kernel(num_layers, block_b, seq_len,
                          idx_ref, embed_ref,
                          wq_ref, bq_ref, wk_ref, bk_ref, wv_ref, bv_ref,
                          w1_ref, b1_ref, w2_ref, b2_ref,
                          wout_ref, bout_ref,
                          out_ref, attn_ref):
    M = idx_ref.shape[0]            # block_b * seq_len token rows
    V, D = embed_ref.shape
    T = seq_len

    # ---- embedding gather in-kernel: one-hot(indices) @ table on the MXU ----
    # TODO(synk): switch to a row-gather (pl.Element index_map / manual DMA)
    # if vocab_size grows beyond a few hundred; fine at V=32 (4 KiB table).
    ids = idx_ref[...]                                              # [M, 1] int32
    vocab_iota = jax.lax.broadcasted_iota(jnp.int32, (M, V), 1)     # [M, V]
    one_hot = (vocab_iota == ids).astype(jnp.float32)
    x = jnp.dot(one_hot, embed_ref[...],
                preferred_element_type=jnp.float32)                 # [M, D]

    # Hoisted zero block used to lane-pad attention maps before storing
    # (JAX does not CSE broadcasts; keep it out of the loops).
    attn_lane_pad = jnp.zeros((T, LANES - T), jnp.float32)

    # ---- static Python loop over layers (num_layers is small & static) ----
    for l in range(num_layers):
        # Separate q/k/v projections: each is a single MXU push at this size;
        # avoids slicing a fused QKV result at non-128-aligned lane offsets.
        q = jnp.dot(x, wq_ref[l], preferred_element_type=jnp.float32) + bq_ref[l]
        k = jnp.dot(x, wk_ref[l], preferred_element_type=jnp.float32) + bk_ref[l]
        v = jnp.dot(x, wv_ref[l], preferred_element_type=jnp.float32) + bv_ref[l]

        # Per-sequence attention.  Static sublane slices at multiples of T(=8)
        # are free views; attention must not mix tokens of different sequences.
        h_rows = []
        for b in range(block_b):
            qb = q[b * T:(b + 1) * T, :]             # [T, di] (scale pre-folded)
            kb = k[b * T:(b + 1) * T, :]             # [T, di]
            vb = v[b * T:(b + 1) * T, :]             # [T, D]
            # Contract the LAST dim of both operands: no kb.T / XLU transpose.
            scores = jax.lax.dot_general(
                qb, kb, (((1,), (1,)), ((), ())),
                preferred_element_type=jnp.float32)                 # [T, T]
            scores = scores - jnp.max(scores, axis=-1, keepdims=True)
            e = jnp.exp(scores)
            inv = pl.reciprocal(jnp.sum(e, axis=-1, keepdims=True), approx=False)
            attn = e * inv                                          # [T, T]
            # Lane-dense store of the attention map (pad T -> 128 lanes).
            attn_ref[b, l] = jnp.concatenate([attn, attn_lane_pad], axis=1)
            h_rows.append(jnp.dot(attn, vb, preferred_element_type=jnp.float32))
        h = h_rows[0] if block_b == 1 else jnp.concatenate(h_rows, axis=0)  # [M, D]

        x_res = h + x

        # MLP
        y = jnp.dot(x_res, w1_ref[l], preferred_element_type=jnp.float32) + b1_ref[l]
        y = jnp.maximum(y, 0.0)
        y = jnp.dot(y, w2_ref[l], preferred_element_type=jnp.float32) + b2_ref[l]
        x = y + x_res

    # ---- output head: linear + softmax over the real classes only ----
    # wout/bout are pre-padded to 128 lanes (bias = -1e30 in pad columns so
    # exp() of pad lanes is exactly 0); the store is a full lane-dense slab.
    logits = jnp.dot(x, wout_ref[...],
                     preferred_element_type=jnp.float32) + bout_ref[...]    # [M, 128]
    logits = logits - jnp.max(logits, axis=-1, keepdims=True)
    e = jnp.exp(logits)
    probs = e * pl.reciprocal(jnp.sum(e, axis=-1, keepdims=True), approx=False)
    out_ref[...] = probs.astype(out_ref.dtype)


# ---------------------------------------------------------------------------
# Wrapper: single pallas_call, grid over "parallel" blocks of sequences
# ---------------------------------------------------------------------------
def _resident_spec(arr):
    """Full-array block whose index never changes with the grid (stays in VMEM)."""
    ndim = arr.ndim
    return pl.BlockSpec(arr.shape, lambda i, _n=ndim: (0,) * _n)


def _prep_params(params, d_internal):
    """Stack per-layer weights [L, ...], fold 1/sqrt(d_internal) into Wq/bq,
    and pad the output head to a lane-dense (128-wide) weight/bias."""
    scale = 1.0 / (float(d_internal) ** 0.5)
    layers = params["layers"]
    wq = jnp.stack([l[0] * scale for l in layers])
    bq = jnp.stack([l[1] * scale for l in layers])
    wk = jnp.stack([l[2] for l in layers])
    bk = jnp.stack([l[3] for l in layers])
    wv = jnp.stack([l[4] for l in layers])
    bv = jnp.stack([l[5] for l in layers])
    w1 = jnp.stack([l[6] for l in layers])
    b1 = jnp.stack([l[7] for l in layers])
    w2 = jnp.stack([l[8] for l in layers])
    b2 = jnp.stack([l[9] for l in layers])
    w_out, b_out = params["w_out"], params["b_out"]
    D, C = w_out.shape
    wout_pad = jnp.zeros((D, LANES), jnp.float32).at[:, :C].set(w_out)
    bout_pad = jnp.full((1, LANES), NEG_INF, jnp.float32).at[:, :C].set(b_out)
    return (wq, bq, wk, bk, wv, bv, w1, b1, w2, b2, wout_pad, bout_pad)


def transformer_forward_batched(indices, params, d_internal, *, block_b=None):
    """Forward pass for a batch of sequences, `indices` of shape [B, T].

    Returns (probs [B, T, C], [attn_layer_0 [B, T, T], ...]).

    One fused pallas_call: in-kernel embedding gather, all transformer layers,
    and the output head + softmax.  The grid iterates over blocks of `block_b`
    sequences; the axis is "parallel" (v7x's two TensorCores split it) and
    block_b*T token rows feed every matmul, filling the MXU M dimension.
    """
    indices = jnp.asarray(indices, jnp.int32)
    B, T = indices.shape
    embed = params["embed"]
    V, D = embed.shape
    C = params["w_out"].shape[1]
    L = len(params["layers"])

    if block_b is None:
        block_b = B
    assert B % block_b == 0, "batch must be divisible by block_b"
    n_blocks = B // block_b
    m_blk = block_b * T

    weights = _prep_params(params, d_internal)
    # Out-of-range indices would silently produce a zero embedding row here
    # (PyTorch's nn.Embedding would raise); callers should validate indices.
    idx2d = indices.reshape(B * T, 1)

    kernel = functools.partial(_fused_forward_kernel, L, block_b, T)

    in_arrays = (idx2d, embed) + weights
    in_specs = [pl.BlockSpec((m_blk, 1), lambda i: (i, 0))] + \
               [_resident_spec(a) for a in in_arrays[1:]]

    # NOTE: at large T the resident [B, L, T, 128] attention output should be
    # blocked/streamed per tile (VMEM pressure on v7x); negligible at T=8.
    out_pad, attn_pad = pl.pallas_call(
        kernel,
        grid=(n_blocks,),
        in_specs=in_specs,
        out_specs=(pl.BlockSpec((m_blk, LANES), lambda i: (i, 0)),
                   pl.BlockSpec((block_b, L, T, LANES), lambda i: (i, 0, 0, 0))),
        out_shape=(jax.ShapeDtypeStruct((B * T, LANES), jnp.float32),
                   jax.ShapeDtypeStruct((B, L, T, LANES), jnp.float32)),
        compiler_params=pltpu.CompilerParams(
            dimension_semantics=("parallel",)),
    )(*in_arrays)

    probs = out_pad[:, :C].reshape(B, T, C)
    attn = attn_pad[..., :T]                      # [B, L, T, T]
    attention_maps = [attn[:, l] for l in range(L)]
    return probs, attention_maps


def transformer_forward(indices, params, d_internal):
    """Single-sequence forward matching the PyTorch module: indices [T]."""
    probs, maps = transformer_forward_batched(indices[None, :], params, d_internal)
    return probs[0], [m[0] for m in maps]


# ---------------------------------------------------------------------------
# Pure-JAX reference (for correctness validation of the fused kernel)
# ---------------------------------------------------------------------------
def reference_forward(indices, params, d_internal):
    x = jnp.take(params["embed"], indices, axis=0)
    scale = 1.0 / (float(d_internal) ** 0.5)
    attns = []
    for (wq, bq, wk, bk, wv, bv, w1, b1, w2, b2) in params["layers"]:
        q = x @ wq + bq
        k = x @ wk + bk
        v = x @ wv + bv
        a = jax.nn.softmax((q @ k.T) * scale, axis=-1)
        h = a @ v
        xr = h + x
        y = jnp.maximum(xr @ w1 + b1, 0.0) @ w2 + b2
        x = y + xr
        attns.append(a)
    logits = x @ params["w_out"] + params["b_out"]
    return jax.nn.softmax(logits, axis=-1), attns


# ---------------------------------------------------------------------------
# Deterministic parameter construction (PyTorch-style uniform(-1/sqrt(in), .))
# ---------------------------------------------------------------------------
def _linear_params(key, d_in, d_out):
    kw, kb = jax.random.split(key)
    bound = 1.0 / (d_in ** 0.5)
    w = jax.random.uniform(kw, (d_in, d_out), jnp.float32, -bound, bound)  # [in, out]
    b = jax.random.uniform(kb, (1, d_out), jnp.float32, -bound, bound)
    return w, b


def make_params(key, vocab_size, d_model, d_internal, num_classes, num_layers):
    keys = jax.random.split(key, 2 + num_layers)
    embed = jax.random.normal(keys[0], (vocab_size, d_model), jnp.float32)
    layers = []
    for j in range(num_layers):
        kq, kk, kv, k1, k2 = jax.random.split(keys[1 + j], 5)
        wq, bq = _linear_params(kq, d_model, d_internal)
        wk, bk = _linear_params(kk, d_model, d_internal)
        wv, bv = _linear_params(kv, d_model, d_model)
        w1, b1 = _linear_params(k1, d_model, d_model)
        w2, b2 = _linear_params(k2, d_model, d_model)
        layers.append((wq, bq, wk, bk, wv, bv, w1, b1, w2, b2))
    w_out, b_out = _linear_params(keys[-1], d_model, num_classes)
    return {"embed": embed, "layers": layers, "w_out": w_out, "b_out": b_out}


# ---------------------------------------------------------------------------
if __name__ == "__main__":
    vocab_size = 32
    d_model = 32
    d_internal = 16
    num_classes = 8
    num_layers = 2
    seq_len = 8

    key = jax.random.PRNGKey(0)
    k_params, k_idx, k_batch = jax.random.split(key, 3)
    params = make_params(k_params, vocab_size, d_model, d_internal,
                         num_classes, num_layers)

    # --- single sequence (the module's forward signature) ---
    indices = jax.random.randint(k_idx, (seq_len,), 0, vocab_size)
    # nn.Embedding would raise on out-of-range indices; the in-kernel one-hot
    # gather would silently return a zero row instead, so check explicitly.
    assert bool(jnp.all((indices >= 0) & (indices < vocab_size)))

    out, attention_maps = transformer_forward(indices, params, d_internal)
    out = jax.block_until_ready(out)
    for a in attention_maps:
        jax.block_until_ready(a)

    assert out.shape == (seq_len, num_classes)
    assert bool(jnp.allclose(jnp.sum(out, axis=-1), 1.0, atol=1e-4))
    assert all(a.shape == (seq_len, seq_len) for a in attention_maps)
    assert all(bool(jnp.allclose(jnp.sum(a, axis=-1), 1.0, atol=1e-4))
               for a in attention_maps)

    ref_out, ref_attns = reference_forward(indices, params, d_internal)
    assert bool(jnp.allclose(out, ref_out, atol=1e-3, rtol=1e-3))
    for a, ra in zip(attention_maps, ref_attns):
        assert bool(jnp.allclose(a, ra, atol=1e-3, rtol=1e-3))

    # --- batched path: 32 sequences, 16 per grid step (128 MXU rows/step;
    #     grid axis "parallel" so v7x's second TensorCore takes half the work)
    batch = 32
    idx_b = jax.random.randint(k_batch, (batch, seq_len), 0, vocab_size)
    bout, bmaps = transformer_forward_batched(idx_b, params, d_internal,
                                              block_b=16)
    bout = jax.block_until_ready(bout)
    assert bout.shape == (batch, seq_len, num_classes)

    ref_jit = jax.jit(lambda idx: reference_forward(idx, params, d_internal))
    for b in range(batch):
        r_out, r_attns = ref_jit(idx_b[b])
        assert bool(jnp.allclose(bout[b], r_out, atol=1e-3, rtol=1e-3))
        for l in range(num_layers):
            assert bool(jnp.allclose(bmaps[l][b], r_attns[l],
                                     atol=1e-3, rtol=1e-3))

    print("KERNEL_OK")
</pallas_src>

<mosaic_0001>
module attributes {stable_mosaic.version = 11 : i64} {
  func.func @_fused_forward_kernel(%arg0: i32, %arg1: memref<8x1xi32, #tpu.memory_space<vmem>>, %arg2: memref<32x32xf32, #tpu.memory_space<vmem>>, %arg3: memref<2x32x16xf32, #tpu.memory_space<vmem>>, %arg4: memref<2x1x16xf32, #tpu.memory_space<vmem>>, %arg5: memref<2x32x16xf32, #tpu.memory_space<vmem>>, %arg6: memref<2x1x16xf32, #tpu.memory_space<vmem>>, %arg7: memref<2x32x32xf32, #tpu.memory_space<vmem>>, %arg8: memref<2x1x32xf32, #tpu.memory_space<vmem>>, %arg9: memref<2x32x32xf32, #tpu.memory_space<vmem>>, %arg10: memref<2x1x32xf32, #tpu.memory_space<vmem>>, %arg11: memref<2x32x32xf32, #tpu.memory_space<vmem>>, %arg12: memref<2x1x32xf32, #tpu.memory_space<vmem>>, %arg13: memref<32x128xf32, #tpu.memory_space<vmem>>, %arg14: memref<1x128xf32, #tpu.memory_space<vmem>>, %arg15: memref<8x128xf32, #tpu.memory_space<vmem>>, %arg16: memref<1x2x8x128xf32, #tpu.memory_space<vmem>>) attributes {dimension_semantics = [#tpu.dimension_semantics<parallel>], iteration_bounds = array<i64: 1>, scalar_prefetch = 0 : i64, scratch_operands = 0 : i64, tpu.core_type = #tpu.core_type<tc>, window_params = [{transform_indices = @transform_0, window_bounds = array<i64: 8, 1>}, {pipeline_mode = #tpu.pipeline_mode<synchronous>, transform_indices = @transform_1, window_bounds = array<i64: 32, 32>}, {pipeline_mode = #tpu.pipeline_mode<synchronous>, transform_indices = @transform_2, window_bounds = array<i64: 2, 32, 16>}, {pipeline_mode = #tpu.pipeline_mode<synchronous>, transform_indices = @transform_3, window_bounds = array<i64: 2, 1, 16>}, {pipeline_mode = #tpu.pipeline_mode<synchronous>, transform_indices = @transform_4, window_bounds = array<i64: 2, 32, 16>}, {pipeline_mode = #tpu.pipeline_mode<synchronous>, transform_indices = @transform_5, window_bounds = array<i64: 2, 1, 16>}, {pipeline_mode = #tpu.pipeline_mode<synchronous>, transform_indices = @transform_6, window_bounds = array<i64: 2, 32, 32>}, {pipeline_mode = #tpu.pipeline_mode<synchronous>, transform_indices = @transform_7, window_bounds = array<i64: 2, 1, 32>}, {pipeline_mode = #tpu.pipeline_mode<synchronous>, transform_indices = @transform_8, window_bounds = array<i64: 2, 32, 32>}, {pipeline_mode = #tpu.pipeline_mode<synchronous>, transform_indices = @transform_9, window_bounds = array<i64: 2, 1, 32>}, {pipeline_mode = #tpu.pipeline_mode<synchronous>, transform_indices = @transform_10, window_bounds = array<i64: 2, 32, 32>}, {pipeline_mode = #tpu.pipeline_mode<synchronous>, transform_indices = @transform_11, window_bounds = array<i64: 2, 1, 32>}, {pipeline_mode = #tpu.pipeline_mode<synchronous>, transform_indices = @transform_12, window_bounds = array<i64: 32, 128>}, {pipeline_mode = #tpu.pipeline_mode<synchronous>, transform_indices = @transform_13, window_bounds = array<i64: 1, 128>}, {transform_indices = @transform_14, window_bounds = array<i64: 8, 128>}, {transform_indices = @transform_15, window_bounds = array<i64: 1, 2, 8, 128>}]} {
    %c0 = arith.constant 0 : index
    %c0_0 = arith.constant 0 : index
    %0 = vector.load %arg1[%c0, %c0_0] : memref<8x1xi32, #tpu.memory_space<vmem>>, vector<8x1xi32>
    %1 = tpu.iota {dimensions = array<i32: 1>} : vector<8x32xi32>
    %2 = vector.broadcast %0 : vector<8x1xi32> to vector<8x32xi32>
    %3 = arith.cmpi eq, %1, %2 : vector<8x32xi32>
    %4 = arith.extui %3 : vector<8x32xi1> to vector<8x32xi32>
    %5 = arith.sitofp %4 : vector<8x32xi32> to vector<8x32xf32>
    %c0_1 = arith.constant 0 : index
    %c0_2 = arith.constant 0 : index
    %6 = vector.load %arg2[%c0_1, %c0_2] : memref<32x32xf32, #tpu.memory_space<vmem>>, vector<32x32xf32>
    %cst = arith.constant dense<0.000000e+00> : vector<8x32xf32>
    %7 = tpu.matmul %5, %6, %cst {dimension_numbers = #tpu.dot_dimension_numbers<[1], [0], [0], [1], [0, 0, 1, 1], [], []>} : vector<8x32xf32>, vector<32x32xf32>, vector<8x32xf32> -> vector<8x32xf32>
    %cst_3 = arith.constant 0.000000e+00 : f32
    %8 = vector.broadcast %cst_3 : f32 to vector<8x120xf32>
    %c0_4 = arith.constant 0 : index
    %c0_5 = arith.constant 0 : index
    %c0_6 = arith.constant 0 : index
    %9 = vector.load %arg3[%c0_4, %c0_5, %c0_6] : memref<2x32x16xf32, #tpu.memory_space<vmem>>, vector<1x32x16xf32>
    %10 = vector.shape_cast %9 : vector<1x32x16xf32> to vector<32x16xf32>
    %cst_7 = arith.constant dense<0.000000e+00> : vector<8x16xf32>
    %11 = tpu.matmul %7, %10, %cst_7 {dimension_numbers = #tpu.dot_dimension_numbers<[1], [0], [0], [1], [0, 0, 1, 1], [], []>} : vector<8x32xf32>, vector<32x16xf32>, vector<8x16xf32> -> vector<8x16xf32>
    %c0_8 = arith.constant 0 : index
    %c0_9 = arith.constant 0 : index
    %c0_10 = arith.constant 0 : index
    %12 = vector.load %arg4[%c0_8, %c0_9, %c0_10] : memref<2x1x16xf32, #tpu.memory_space<vmem>>, vector<1x1x16xf32>
    %13 = vector.shape_cast %12 : vector<1x1x16xf32> to vector<1x16xf32>
    %14 = vector.broadcast %13 : vector<1x16xf32> to vector<8x16xf32>
    %15 = arith.addf %11, %14 : vector<8x16xf32>
    %c0_11 = arith.constant 0 : index
    %c0_12 = arith.constant 0 : index
    %c0_13 = arith.constant 0 : index
    %16 = vector.load %arg5[%c0_11, %c0_12, %c0_13] : memref<2x32x16xf32, #tpu.memory_space<vmem>>, vector<1x32x16xf32>
    %17 = vector.shape_cast %16 : vector<1x32x16xf32> to vector<32x16xf32>
    %cst_14 = arith.constant dense<0.000000e+00> : vector<8x16xf32>
    %18 = tpu.matmul %7, %17, %cst_14 {dimension_numbers = #tpu.dot_dimension_numbers<[1], [0], [0], [1], [0, 0, 1, 1], [], []>} : vector<8x32xf32>, vector<32x16xf32>, vector<8x16xf32> -> vector<8x16xf32>
    %c0_15 = arith.constant 0 : index
    %c0_16 = arith.constant 0 : index
    %c0_17 = arith.constant 0 : index
    %19 = vector.load %arg6[%c0_15, %c0_16, %c0_17] : memref<2x1x16xf32, #tpu.memory_space<vmem>>, vector<1x1x16xf32>
    %20 = vector.shape_cast %19 : vector<1x1x16xf32> to vector<1x16xf32>
    %21 = vector.broadcast %20 : vector<1x16xf32> to vector<8x16xf32>
    %22 = arith.addf %18, %21 : vector<8x16xf32>
    %c0_18 = arith.constant 0 : index
    %c0_19 = arith.constant 0 : index
    %c0_20 = arith.constant 0 : index
    %23 = vector.load %arg7[%c0_18, %c0_19, %c0_20] : memref<2x32x32xf32, #tpu.memory_space<vmem>>, vector<1x32x32xf32>
    %24 = vector.shape_cast %23 : vector<1x32x32xf32> to vector<32x32xf32>
    %cst_21 = arith.constant dense<0.000000e+00> : vector<8x32xf32>
    %25 = tpu.matmul %7, %24, %cst_21 {dimension_numbers = #tpu.dot_dimension_numbers<[1], [0], [0], [1], [0, 0, 1, 1], [], []>} : vector<8x32xf32>, vector<32x32xf32>, vector<8x32xf32> -> vector<8x32xf32>
    %c0_22 = arith.constant 0 : index
    %c0_23 = arith.constant 0 : index
    %c0_24 = arith.constant 0 : index
    %26 = vector.load %arg8[%c0_22, %c0_23, %c0_24] : memref<2x1x32xf32, #tpu.memory_space<vmem>>, vector<1x1x32xf32>
    %27 = vector.shape_cast %26 : vector<1x1x32xf32> to vector<1x32xf32>
    %28 = vector.broadcast %27 : vector<1x32xf32> to vector<8x32xf32>
    %29 = arith.addf %25, %28 : vector<8x32xf32>
    %cst_25 = arith.constant dense<0.000000e+00> : vector<8x8xf32>
    %30 = tpu.matmul %15, %22, %cst_25 {dimension_numbers = #tpu.dot_dimension_numbers<[1], [1], [0], [0], [0, 0, 1, 0], [], []>} : vector<8x16xf32>, vector<8x16xf32>, vector<8x8xf32> -> vector<8x8xf32>
    %cst_26 = arith.constant dense<0xFF800000> : vector<8xf32>
    %31 = vector.multi_reduction <maximumf>, %30, %cst_26 [1] : vector<8x8xf32> to vector<8xf32>
    %32 = vector.shape_cast %31 : vector<8xf32> to vector<8x1xf32>
    %33 = vector.broadcast %32 : vector<8x1xf32> to vector<8x8xf32>
    %34 = arith.subf %30, %33 : vector<8x8xf32>
    %35 = math.exp %34 : vector<8x8xf32>
    %cst_27 = arith.constant dense<0.000000e+00> : vector<8xf32>
    %36 = vector.multi_reduction <add>, %35, %cst_27 [1] : vector<8x8xf32> to vector<8xf32>
    %37 = vector.shape_cast %36 : vector<8xf32> to vector<8x1xf32>
    %38 = tpu.reciprocal %37 : vector<8x1xf32> -> vector<8x1xf32>
    %39 = vector.broadcast %38 : vector<8x1xf32> to vector<8x8xf32>
    %40 = arith.mulf %35, %39 : vector<8x8xf32>
    %41 = tpu.concatenate %40, %8 in 1 : vector<8x8xf32>, vector<8x120xf32> -> vector<8x128xf32>
    %c0_28 = arith.constant 0 : index
    %c0_29 = arith.constant 0 : index
    %c0_30 = arith.constant 0 : index
    %c0_31 = arith.constant 0 : index
    %42 = vector.load %arg16[%c0_28, %c0_29, %c0_30, %c0_31] : memref<1x2x8x128xf32, #tpu.memory_space<vmem>>, vector<1x1x8x128xf32>
    %43 = vector.shape_cast %42 : vector<1x1x8x128xf32> to vector<8x128xf32>
    %44 = vector.shape_cast %41 : vector<8x128xf32> to vector<1x1x8x128xf32>
    tpu.vector_store %arg16[%c0_28, %c0_29, %c0_30, %c0_31], %44 {strides = array<i32>} : memref<1x2x8x128xf32, #tpu.memory_space<vmem>>, vector<1x1x8x128xf32>,
    %cst_32 = arith.constant dense<0.000000e+00> : vector<8x32xf32>
    %45 = tpu.matmul %40, %29, %cst_32 {dimension_numbers = #tpu.dot_dimension_numbers<[1], [0], [0], [1], [0, 0, 1, 1], [], []>} : vector<8x8xf32>, vector<8x32xf32>, vector<8x32xf32> -> vector<8x32xf32>
    %46 = arith.addf %45, %7 : vector<8x32xf32>
    %c0_33 = arith.constant 0 : index
    %c0_34 = arith.constant 0 : index
    %c0_35 = arith.constant 0 : index
    %47 = vector.load %arg9[%c0_33, %c0_34, %c0_35] : memref<2x32x32xf32, #tpu.memory_space<vmem>>, vector<1x32x32xf32>
    %48 = vector.shape_cast %47 : vector<1x32x32xf32> to vector<32x32xf32>
    %cst_36 = arith.constant dense<0.000000e+00> : vector<8x32xf32>
    %49 = tpu.matmul %46, %48, %cst_36 {dimension_numbers = #tpu.dot_dimension_numbers<[1], [0], [0], [1], [0, 0, 1, 1], [], []>} : vector<8x32xf32>, vector<32x32xf32>, vector<8x32xf32> -> vector<8x32xf32>
    %c0_37 = arith.constant 0 : index
    %c0_38 = arith.constant 0 : index
    %c0_39 = arith.constant 0 : index
    %50 = vector.load %arg10[%c0_37, %c0_38, %c0_39] : memref<2x1x32xf32, #tpu.memory_space<vmem>>, vector<1x1x32xf32>
    %51 = vector.shape_cast %50 : vector<1x1x32xf32> to vector<1x32xf32>
    %52 = vector.broadcast %51 : vector<1x32xf32> to vector<8x32xf32>
    %53 = arith.addf %49, %52 : vector<8x32xf32>
    %cst_40 = arith.constant 0.000000e+00 : f32
    %54 = vector.broadcast %cst_40 : f32 to vector<8x32xf32>
    %55 = arith.maximumf %53, %54 : vector<8x32xf32>
    %c0_41 = arith.constant 0 : index
    %c0_42 = arith.constant 0 : index
    %c0_43 = arith.constant 0 : index
    %56 = vector.load %arg11[%c0_41, %c0_42, %c0_43] : memref<2x32x32xf32, #tpu.memory_space<vmem>>, vector<1x32x32xf32>
    %57 = vector.shape_cast %56 : vector<1x32x32xf32> to vector<32x32xf32>
    %cst_44 = arith.constant dense<0.000000e+00> : vector<8x32xf32>
    %58 = tpu.matmul %55, %57, %cst_44 {dimension_numbers = #tpu.dot_dimension_numbers<[1], [0], [0], [1], [0, 0, 1, 1], [], []>} : vector<8x32xf32>, vector<32x32xf32>, vector<8x32xf32> -> vector<8x32xf32>
    %c0_45 = arith.constant 0 : index
    %c0_46 = arith.constant 0 : index
    %c0_47 = arith.constant 0 : index
    %59 = vector.load %arg12[%c0_45, %c0_46, %c0_47] : memref<2x1x32xf32, #tpu.memory_space<vmem>>, vector<1x1x32xf32>
    %60 = vector.shape_cast %59 : vector<1x1x32xf32> to vector<1x32xf32>
    %61 = vector.broadcast %60 : vector<1x32xf32> to vector<8x32xf32>
    %62 = arith.addf %58, %61 : vector<8x32xf32>
    %63 = arith.addf %62, %46 : vector<8x32xf32>
    %c1 = arith.constant 1 : index
    %c0_48 = arith.constant 0 : index
    %c0_49 = arith.constant 0 : index
    %64 = vector.load %arg3[%c1, %c0_48, %c0_49] : memref<2x32x16xf32, #tpu.memory_space<vmem>>, vector<1x32x16xf32>
    %65 = vector.shape_cast %64 : vector<1x32x16xf32> to vector<32x16xf32>
    %cst_50 = arith.constant dense<0.000000e+00> : vector<8x16xf32>
    %66 = tpu.matmul %63, %65, %cst_50 {dimension_numbers = #tpu.dot_dimension_numbers<[1], [0], [0], [1], [0, 0, 1, 1], [], []>} : vector<8x32xf32>, vector<32x16xf32>, vector<8x16xf32> -> vector<8x16xf32>
    %c1_51 = arith.constant 1 : index
    %c0_52 = arith.constant 0 : index
    %c0_53 = arith.constant 0 : index
    %67 = vector.load %arg4[%c1_51, %c0_52, %c0_53] : memref<2x1x16xf32, #tpu.memory_space<vmem>>, vector<1x1x16xf32>
    %68 = vector.shape_cast %67 : vector<1x1x16xf32> to vector<1x16xf32>
    %69 = vector.broadcast %68 : vector<1x16xf32> to vector<8x16xf32>
    %70 = arith.addf %66, %69 : vector<8x16xf32>
    %c1_54 = arith.constant 1 : index
    %c0_55 = arith.constant 0 : index
    %c0_56 = arith.constant 0 : index
    %71 = vector.load %arg5[%c1_54, %c0_55, %c0_56] : memref<2x32x16xf32, #tpu.memory_space<vmem>>, vector<1x32x16xf32>
    %72 = vector.shape_cast %71 : vector<1x32x16xf32> to vector<32x16xf32>
    %cst_57 = arith.constant dense<0.000000e+00> : vector<8x16xf32>
    %73 = tpu.matmul %63, %72, %cst_57 {dimension_numbers = #tpu.dot_dimension_numbers<[1], [0], [0], [1], [0, 0, 1, 1], [], []>} : vector<8x32xf32>, vector<32x16xf32>, vector<8x16xf32> -> vector<8x16xf32>
    %c1_58 = arith.constant 1 : index
    %c0_59 = arith.constant 0 : index
    %c0_60 = arith.constant 0 : index
    %74 = vector.load %arg6[%c1_58, %c0_59, %c0_60] : memref<2x1x16xf32, #tpu.memory_space<vmem>>, vector<1x1x16xf32>
    %75 = vector.shape_cast %74 : vector<1x1x16xf32> to vector<1x16xf32>
    %76 = vector.broadcast %75 : vector<1x16xf32> to vector<8x16xf32>
    %77 = arith.addf %73, %76 : vector<8x16xf32>
    %c1_61 = arith.constant 1 : index
    %c0_62 = arith.constant 0 : index
    %c0_63 = arith.constant 0 : index
    %78 = vector.load %arg7[%c1_61, %c0_62, %c0_63] : memref<2x32x32xf32, #tpu.memory_space<vmem>>, vector<1x32x32xf32>
    %79 = vector.shape_cast %78 : vector<1x32x32xf32> to vector<32x32xf32>
    %cst_64 = arith.constant dense<0.000000e+00> : vector<8x32xf32>
    %80 = tpu.matmul %63, %79, %cst_64 {dimension_numbers = #tpu.dot_dimension_numbers<[1], [0], [0], [1], [0, 0, 1, 1], [], []>} : vector<8x32xf32>, vector<32x32xf32>, vector<8x32xf32> -> vector<8x32xf32>
    %c1_65 = arith.constant 1 : index
    %c0_66 = arith.constant 0 : index
    %c0_67 = arith.constant 0 : index
    %81 = vector.load %arg8[%c1_65, %c0_66, %c0_67] : memref<2x1x32xf32, #tpu.memory_space<vmem>>, vector<1x1x32xf32>
    %82 = vector.shape_cast %81 : vector<1x1x32xf32> to vector<1x32xf32>
    %83 = vector.broadcast %82 : vector<1x32xf32> to vector<8x32xf32>
    %84 = arith.addf %80, %83 : vector<8x32xf32>
    %cst_68 = arith.constant dense<0.000000e+00> : vector<8x8xf32>
    %85 = tpu.matmul %70, %77, %cst_68 {dimension_numbers = #tpu.dot_dimension_numbers<[1], [1], [0], [0], [0, 0, 1, 0], [], []>} : vector<8x16xf32>, vector<8x16xf32>, vector<8x8xf32> -> vector<8x8xf32>
    %cst_69 = arith.constant dense<0xFF800000> : vector<8xf32>
    %86 = vector.multi_reduction <maximumf>, %85, %cst_69 [1] : vector<8x8xf32> to vector<8xf32>
    %87 = vector.shape_cast %86 : vector<8xf32> to vector<8x1xf32>
    %88 = vector.broadcast %87 : vector<8x1xf32> to vector<8x8xf32>
    %89 = arith.subf %85, %88 : vector<8x8xf32>
    %90 = math.exp %89 : vector<8x8xf32>
    %cst_70 = arith.constant dense<0.000000e+00> : vector<8xf32>
    %91 = vector.multi_reduction <add>, %90, %cst_70 [1] : vector<8x8xf32> to vector<8xf32>
    %92 = vector.shape_cast %91 : vector<8xf32> to vector<8x1xf32>
    %93 = tpu.reciprocal %92 : vector<8x1xf32> -> vector<8x1xf32>
    %94 = vector.broadcast %93 : vector<8x1xf32> to vector<8x8xf32>
    %95 = arith.mulf %90, %94 : vector<8x8xf32>
    %96 = tpu.concatenate %95, %8 in 1 : vector<8x8xf32>, vector<8x120xf32> -> vector<8x128xf32>
    %c0_71 = arith.constant 0 : index
    %c1_72 = arith.constant 1 : index
    %c0_73 = arith.constant 0 : index
    %c0_74 = arith.constant 0 : index
    %97 = vector.load %arg16[%c0_71, %c1_72, %c0_73, %c0_74] : memref<1x2x8x128xf32, #tpu.memory_space<vmem>>, vector<1x1x8x128xf32>
    %98 = vector.shape_cast %97 : vector<1x1x8x128xf32> to vector<8x128xf32>
    %99 = vector.shape_cast %96 : vector<8x128xf32> to vector<1x1x8x128xf32>
    tpu.vector_store %arg16[%c0_71, %c1_72, %c0_73, %c0_74], %99 {strides = array<i32>} : memref<1x2x8x128xf32, #tpu.memory_space<vmem>>, vector<1x1x8x128xf32>,
    %cst_75 = arith.constant dense<0.000000e+00> : vector<8x32xf32>
    %100 = tpu.matmul %95, %84, %cst_75 {dimension_numbers = #tpu.dot_dimension_numbers<[1], [0], [0], [1], [0, 0, 1, 1], [], []>} : vector<8x8xf32>, vector<8x32xf32>, vector<8x32xf32> -> vector<8x32xf32>
    %101 = arith.addf %100, %63 : vector<8x32xf32>
    %c1_76 = arith.constant 1 : index
    %c0_77 = arith.constant 0 : index
    %c0_78 = arith.constant 0 : index
    %102 = vector.load %arg9[%c1_76, %c0_77, %c0_78] : memref<2x32x32xf32, #tpu.memory_space<vmem>>, vector<1x32x32xf32>
    %103 = vector.shape_cast %102 : vector<1x32x32xf32> to vector<32x32xf32>
    %cst_79 = arith.constant dense<0.000000e+00> : vector<8x32xf32>
    %104 = tpu.matmul %101, %103, %cst_79 {dimension_numbers = #tpu.dot_dimension_numbers<[1], [0], [0], [1], [0, 0, 1, 1], [], []>} : vector<8x32xf32>, vector<32x32xf32>, vector<8x32xf32> -> vector<8x32xf32>
    %c1_80 = arith.constant 1 : index
    %c0_81 = arith.constant 0 : index
    %c0_82 = arith.constant 0 : index
    %105 = vector.load %arg10[%c1_80, %c0_81, %c0_82] : memref<2x1x32xf32, #tpu.memory_space<vmem>>, vector<1x1x32xf32>
    %106 = vector.shape_cast %105 : vector<1x1x32xf32> to vector<1x32xf32>
    %107 = vector.broadcast %106 : vector<1x32xf32> to vector<8x32xf32>
    %108 = arith.addf %104, %107 : vector<8x32xf32>
    %cst_83 = arith.constant 0.000000e+00 : f32
    %109 = vector.broadcast %cst_83 : f32 to vector<8x32xf32>
    %110 = arith.maximumf %108, %109 : vector<8x32xf32>
    %c1_84 = arith.constant 1 : index
    %c0_85 = arith.constant 0 : index
    %c0_86 = arith.constant 0 : index
    %111 = vector.load %arg11[%c1_84, %c0_85, %c0_86] : memref<2x32x32xf32, #tpu.memory_space<vmem>>, vector<1x32x32xf32>
    %112 = vector.shape_cast %111 : vector<1x32x32xf32> to vector<32x32xf32>
    %cst_87 = arith.constant dense<0.000000e+00> : vector<8x32xf32>
    %113 = tpu.matmul %110, %112, %cst_87 {dimension_numbers = #tpu.dot_dimension_numbers<[1], [0], [0], [1], [0, 0, 1, 1], [], []>} : vector<8x32xf32>, vector<32x32xf32>, vector<8x32xf32> -> vector<8x32xf32>
    %c1_88 = arith.constant 1 : index
    %c0_89 = arith.constant 0 : index
    %c0_90 = arith.constant 0 : index
    %114 = vector.load %arg12[%c1_88, %c0_89, %c0_90] : memref<2x1x32xf32, #tpu.memory_space<vmem>>, vector<1x1x32xf32>
    %115 = vector.shape_cast %114 : vector<1x1x32xf32> to vector<1x32xf32>
    %116 = vector.broadcast %115 : vector<1x32xf32> to vector<8x32xf32>
    %117 = arith.addf %113, %116 : vector<8x32xf32>
    %118 = arith.addf %117, %101 : vector<8x32xf32>
    %c0_91 = arith.constant 0 : index
    %c0_92 = arith.constant 0 : index
    %119 = vector.load %arg13[%c0_91, %c0_92] : memref<32x128xf32, #tpu.memory_space<vmem>>, vector<32x128xf32>
    %cst_93 = arith.constant dense<0.000000e+00> : vector<8x128xf32>
    %120 = tpu.matmul %118, %119, %cst_93 {dimension_numbers = #tpu.dot_dimension_numbers<[1], [0], [0], [1], [0, 0, 1, 1], [], []>} : vector<8x32xf32>, vector<32x128xf32>, vector<8x128xf32> -> vector<8x128xf32>
    %c0_94 = arith.constant 0 : index
    %c0_95 = arith.constant 0 : index
    %121 = vector.load %arg14[%c0_94, %c0_95] : memref<1x128xf32, #tpu.memory_space<vmem>>, vector<1x128xf32>
    %122 = vector.broadcast %121 : vector<1x128xf32> to vector<8x128xf32>
    %123 = arith.addf %120, %122 : vector<8x128xf32>
    %cst_96 = arith.constant dense<0xFF800000> : vector<8xf32>
    %124 = vector.multi_reduction <maximumf>, %123, %cst_96 [1] : vector<8x128xf32> to vector<8xf32>
    %125 = vector.shape_cast %124 : vector<8xf32> to vector<8x1xf32>
    %126 = vector.broadcast %125 : vector<8x1xf32> to vector<8x128xf32>
    %127 = arith.subf %123, %126 : vector<8x128xf32>
    %128 = math.exp %127 : vector<8x128xf32>
    %cst_97 = arith.constant dense<0.000000e+00> : vector<8xf32>
    %129 = vector.multi_reduction <add>, %128, %cst_97 [1] : vector<8x128xf32> to vector<8xf32>
    %130 = vector.shape_cast %129 : vector<8xf32> to vector<8x1xf32>
    %131 = tpu.reciprocal %130 : vector<8x1xf32> -> vector<8x1xf32>
    %132 = vector.broadcast %131 : vector<8x1xf32> to vector<8x128xf32>
    %133 = arith.mulf %128, %132 : vector<8x128xf32>
    %c0_98 = arith.constant 0 : index
    %c0_99 = arith.constant 0 : index
    %134 = vector.load %arg15[%c0_98, %c0_99] : memref<8x128xf32, #tpu.memory_space<vmem>>, vector<8x128xf32>
    tpu.vector_store %arg15[%c0_98, %c0_99], %133 {strides = array<i32>} : memref<8x128xf32, #tpu.memory_space<vmem>>, vector<8x128xf32>,
    return
  }
  func.func @transform_0(%arg0: i32) -> (i32, i32) {
    %c0_i32 = arith.constant 0 : i32
    %c0_i32_0 = arith.constant 0 : i32
    return %arg0, %c0_i32 : i32, i32
  }
  func.func @transform_1(%arg0: i32) -> (i32, i32) {
    %c0_i32 = arith.constant 0 : i32
    %c0_i32_0 = arith.constant 0 : i32
    %c0_i32_1 = arith.constant 0 : i32
    return %c0_i32, %c0_i32_0 : i32, i32
  }
  func.func @transform_2(%arg0: i32) -> (i32, i32, i32) {
    %c0_i32 = arith.constant 0 : i32
    %c0_i32_0 = arith.constant 0 : i32
    %c0_i32_1 = arith.constant 0 : i32
    %c0_i32_2 = arith.constant 0 : i32
    return %c0_i32, %c0_i32_0, %c0_i32_1 : i32, i32, i32
  }
  func.func @transform_3(%arg0: i32) -> (i32, i32, i32) {
    %c0_i32 = arith.constant 0 : i32
    %c0_i32_0 = arith.constant 0 : i32
    %c0_i32_1 = arith.constant 0 : i32
    %c0_i32_2 = arith.constant 0 : i32
    return %c0_i32, %c0_i32_0, %c0_i32_1 : i32, i32, i32
  }
  func.func @transform_4(%arg0: i32) -> (i32, i32, i32) {
    %c0_i32 = arith.constant 0 : i32
    %c0_i32_0 = arith.constant 0 : i32
    %c0_i32_1 = arith.constant 0 : i32
    %c0_i32_2 = arith.constant 0 : i32
    return %c0_i32, %c0_i32_0, %c0_i32_1 : i32, i32, i32
  }
  func.func @transform_5(%arg0: i32) -> (i32, i32, i32) {
    %c0_i32 = arith.constant 0 : i32
    %c0_i32_0 = arith.constant 0 : i32
    %c0_i32_1 = arith.constant 0 : i32
    %c0_i32_2 = arith.constant 0 : i32
    return %c0_i32, %c0_i32_0, %c0_i32_1 : i32, i32, i32
  }
  func.func @transform_6(%arg0: i32) -> (i32, i32, i32) {
    %c0_i32 = arith.constant 0 : i32
    %c0_i32_0 = arith.constant 0 : i32
    %c0_i32_1 = arith.constant 0 : i32
    %c0_i32_2 = arith.constant 0 : i32
    return %c0_i32, %c0_i32_0, %c0_i32_1 : i32, i32, i32
  }
  func.func @transform_7(%arg0: i32) -> (i32, i32, i32) {
    %c0_i32 = arith.constant 0 : i32
    %c0_i32_0 = arith.constant 0 : i32
    %c0_i32_1 = arith.constant 0 : i32
    %c0_i32_2 = arith.constant 0 : i32
    return %c0_i32, %c0_i32_0, %c0_i32_1 : i32, i32, i32
  }
  func.func @transform_8(%arg0: i32) -> (i32, i32, i32) {
    %c0_i32 = arith.constant 0 : i32
    %c0_i32_0 = arith.constant 0 : i32
    %c0_i32_1 = arith.constant 0 : i32
    %c0_i32_2 = arith.constant 0 : i32
    return %c0_i32, %c0_i32_0, %c0_i32_1 : i32, i32, i32
  }
  func.func @transform_9(%arg0: i32) -> (i32, i32, i32) {
    %c0_i32 = arith.constant 0 : i32
    %c0_i32_0 = arith.constant 0 : i32
    %c0_i32_1 = arith.constant 0 : i32
    %c0_i32_2 = arith.constant 0 : i32
    return %c0_i32, %c0_i32_0, %c0_i32_1 : i32, i32, i32
  }
  func.func @transform_10(%arg0: i32) -> (i32, i32, i32) {
    %c0_i32 = arith.constant 0 : i32
    %c0_i32_0 = arith.constant 0 : i32
    %c0_i32_1 = arith.constant 0 : i32
    %c0_i32_2 = arith.constant 0 : i32
    return %c0_i32, %c0_i32_0, %c0_i32_1 : i32, i32, i32
  }
  func.func @transform_11(%arg0: i32) -> (i32, i32, i32) {
    %c0_i32 = arith.constant 0 : i32
    %c0_i32_0 = arith.constant 0 : i32
    %c0_i32_1 = arith.constant 0 : i32
    %c0_i32_2 = arith.constant 0 : i32
    return %c0_i32, %c0_i32_0, %c0_i32_1 : i32, i32, i32
  }
  func.func @transform_12(%arg0: i32) -> (i32, i32) {
    %c0_i32 = arith.constant 0 : i32
    %c0_i32_0 = arith.constant 0 : i32
    %c0_i32_1 = arith.constant 0 : i32
    return %c0_i32, %c0_i32_0 : i32, i32
  }
  func.func @transform_13(%arg0: i32) -> (i32, i32) {
    %c0_i32 = arith.constant 0 : i32
    %c0_i32_0 = arith.constant 0 : i32
    %c0_i32_1 = arith.constant 0 : i32
    return %c0_i32, %c0_i32_0 : i32, i32
  }
  func.func @transform_14(%arg0: i32) -> (i32, i32) {
    %c0_i32 = arith.constant 0 : i32
    %c0_i32_0 = arith.constant 0 : i32
    return %arg0, %c0_i32 : i32, i32
  }
  func.func @transform_15(%arg0: i32) -> (i32, i32, i32, i32) {
    %c0_i32 = arith.constant 0 : i32
    %c0_i32_0 = arith.constant 0 : i32
    %c0_i32_1 = arith.constant 0 : i32
    %c0_i32_2 = arith.constant 0 : i32
    return %arg0, %c0_i32, %c0_i32_0, %c0_i32_1 : i32, i32, i32, i32
  }
}

</mosaic_0001>

<llo_original>
// kernel: tpu_custom_call.1
$region0: #{tpu_custom_call.1}
  #allocation0 [shape = 'u32[]', space=smem, size = 0x4, offset = 0x4, fixed_abs, tag = 'smem constant byte address 0x4 - core index']
  #allocation1 [shape = 'u32[144,128]{1,0:T(1,128)}', space=vmem, size = 0x12000, scoped, tag = 'internal scratch']
  %s0 = inlined_call_operand.vmem [shape: s32[8,1], index: 0, kind: input, shape index: {}]
  %s1 = inlined_call_operand.hbm [shape: f32[32,32], index: 1, kind: input, shape index: {}]
  %s2 = inlined_call_operand.vmem [shape: f32[2,32,16], index: 2, kind: input, shape index: {}]
  %s3 = inlined_call_operand.vmem [shape: f32[2,1,16], index: 3, kind: input, shape index: {}]
  %s4 = inlined_call_operand.vmem [shape: f32[2,32,16], index: 4, kind: input, shape index: {}]
  %s5 = inlined_call_operand.hbm [shape: f32[2,1,16], index: 5, kind: input, shape index: {}]
  %s6 = inlined_call_operand.vmem [shape: f32[2,32,32], index: 6, kind: input, shape index: {}]
  %s7 = inlined_call_operand.hbm [shape: f32[2,1,32], index: 7, kind: input, shape index: {}]
  %s8 = inlined_call_operand.vmem [shape: f32[2,32,32], index: 8, kind: input, shape index: {}]
  %s9 = inlined_call_operand.vmem [shape: f32[2,1,32], index: 9, kind: input, shape index: {}]
  %s10 = inlined_call_operand.vmem [shape: f32[2,32,32], index: 10, kind: input, shape index: {}]
  %s11 = inlined_call_operand.vmem [shape: f32[2,1,32], index: 11, kind: input, shape index: {}]
  %s12 = inlined_call_operand.vmem [shape: f32[32,128], index: 12, kind: input, shape index: {}]
  %s13 = inlined_call_operand.vmem [shape: f32[1,128], index: 13, kind: input, shape index: {}]
  %s14 = inlined_call_operand.hbm [shape: f32[8,128], index: 14, kind: output, shape index: {0}]
  %s15 = inlined_call_operand.hbm [shape: f32[1,2,8,128], index: 15, kind: output, shape index: {1}]
  %16 = xla_tuple %s14, %s15
  %s17 = sld [smem:[#allocation0]]
  $region86: #{tpu_custom_call.1} parent=0
    _
  %s19 = ssub.s32 1, %s17
  %s20 = scalar_select 0, %s19, %s17
  $region1: #{tpu_custom_call.1} parent=0
    #allocation2 [shape = 'u8[16384]{0}', space=vmem, size = 0x4000, scoped, tag = 'input window, operand 1, single buffered']
    #allocation3 [shape = 's32[1]{0}', space=sflag, size = 0x4, scoped, tag = 'scoped memory for tpu_custom_call.1']
    #allocation4 [shape = 's32[1]{0}', space=sflag, size = 0x4, scoped, tag = 'scoped memory for tpu_custom_call.1']
    #allocation5 [shape = 'u8[1024]{0}', space=vmem, size = 0x400, scoped, tag = 'input window, operand 5, single buffered']
    #allocation6 [shape = 's32[1]{0}', space=sflag, size = 0x4, scoped, tag = 'scoped memory for tpu_custom_call.1']
    #allocation7 [shape = 'u8[1024]{0}', space=vmem, size = 0x400, scoped, tag = 'input window, operand 7, single buffered']
    #allocation8 [shape = 'u8[4096]{0}', space=vmem, size = 0x1000, scoped, tag = 'output window, operand 0, single buffered']
    #allocation9 [shape = 'u8[8192]{0}', space=vmem, size = 0x2000, scoped, tag = 'output window, operand 1, single buffered']
    #allocation10 [shape = 's32[1]{0}', space=sflag, size = 0x4, scoped, tag = 'scoped memory for tpu_custom_call.1']
    %21 = vsyncpa [#allocation3], 0
    %22 = vsyncpa [#allocation6], 0
    %23 = vsyncpa [#allocation4], 0
    %24 = vsyncpa [#allocation10], 0
    // Predicated region
    $region2: #{tpu_custom_call.1} parent=1 // pred_check
      _
    $region3: #{tpu_custom_call.1} parent=1 // pred_check_branch
      %26 = sbr.rel (0) target = $region5
    $region4: #{tpu_custom_call.1} parent=1 // pred_region
      _
    $region5: #{tpu_custom_call.1} parent=1 // pred_fallthru
      _
    // Predicated region
    $region6: #{tpu_custom_call.1} parent=1 // pred_check
      _
    $region7: #{tpu_custom_call.1} parent=1 // pred_check_branch
      %28 = sbr.rel (0) target = $region9
    $region8: #{tpu_custom_call.1} parent=1 // pred_region
      %s30 = ssub.s32 512, 512
      %31 = vsyncadd [#allocation3], %s30
      %s32 = sshll.u32 [#allocation2], 4
      %s33 = int_to_ptr.vmem [resolvable:$true] %s32
      %38 = dma.hbm_to_vmem [thread:$0]  %s1, 512, %s33, [#allocation3], 128, 128, 8
    $region9: #{tpu_custom_call.1} parent=1 // pred_fallthru
      _
    // Predicated region
    $region10: #{tpu_custom_call.1} parent=1 // pred_check
      _
    $region11: #{tpu_custom_call.1} parent=1 // pred_check_branch
      %40 = sbr.rel (0) target = $region13
    $region12: #{tpu_custom_call.1} parent=1 // pred_region
      _
    $region13: #{tpu_custom_call.1} parent=1 // pred_fallthru
      _
    // Predicated region
    $region14: #{tpu_custom_call.1} parent=1 // pred_check
      _
    $region15: #{tpu_custom_call.1} parent=1 // pred_check_branch
      %42 = sbr.rel (0) target = $region17
    $region16: #{tpu_custom_call.1} parent=1 // pred_region
      _
    $region17: #{tpu_custom_call.1} parent=1 // pred_fallthru
      _
    // Predicated region
    $region18: #{tpu_custom_call.1} parent=1 // pred_check
      _
    $region19: #{tpu_custom_call.1} parent=1 // pred_check_branch
      %44 = sbr.rel (0) target = $region21
    $region20: #{tpu_custom_call.1} parent=1 // pred_region
      _
    $region21: #{tpu_custom_call.1} parent=1 // pred_fallthru
      _
    // Predicated region
    $region22: #{tpu_custom_call.1} parent=1 // pred_check
      _
    $region23: #{tpu_custom_call.1} parent=1 // pred_check_branch
      %46 = sbr.rel (0) target = $region25
    $region24: #{tpu_custom_call.1} parent=1 // pred_region
      %s48 = ssub.s32 32, 32
      %49 = vsyncadd [#allocation6], %s48
      %s50 = sshll.u32 [#allocation5], 4
      %s51 = int_to_ptr.vmem [resolvable:$true] %s50
      %56 = dma.hbm_to_vmem [thread:$0]  %s5, 32, %s51, [#allocation6], 16, 16, 1
    $region25: #{tpu_custom_call.1} parent=1 // pred_fallthru
      _
    // Predicated region
    $region26: #{tpu_custom_call.1} parent=1 // pred_check
      _
    $region27: #{tpu_custom_call.1} parent=1 // pred_check_branch
      %58 = sbr.rel (0) target = $region29
    $region28: #{tpu_custom_call.1} parent=1 // pred_region
      _
    $region29: #{tpu_custom_call.1} parent=1 // pred_fallthru
      _
    // Predicated region
    $region30: #{tpu_custom_call.1} parent=1 // pred_check
      _
    $region31: #{tpu_custom_call.1} parent=1 // pred_check_branch
      %60 = sbr.rel (0) target = $region33
    $region32: #{tpu_custom_call.1} parent=1 // pred_region
      %s62 = ssub.s32 32, 32
      %63 = vsyncadd [#allocation6], %s62
      %s64 = sshll.u32 [#allocation7], 4
      %s65 = int_to_ptr.vmem [resolvable:$true] %s64
      %70 = dma.hbm_to_vmem [thread:$0]  %s7, 32, %s65, [#allocation6], 16, 16, 1
    $region33: #{tpu_custom_call.1} parent=1 // pred_fallthru
      _
    // Predicated region
    $region34: #{tpu_custom_call.1} parent=1 // pred_check
      _
    $region35: #{tpu_custom_call.1} parent=1 // pred_check_branch
      %72 = sbr.rel (0) target = $region37
    $region36: #{tpu_custom_call.1} parent=1 // pred_region
      _
    $region37: #{tpu_custom_call.1} parent=1 // pred_fallthru
      _
    // Predicated region
    $region38: #{tpu_custom_call.1} parent=1 // pred_check
      _
    $region39: #{tpu_custom_call.1} parent=1 // pred_check_branch
      %74 = sbr.rel (0) target = $region41
    $region40: #{tpu_custom_call.1} parent=1 // pred_region
      _
    $region41: #{tpu_custom_call.1} parent=1 // pred_fallthru
      _
    // Predicated region
    $region42: #{tpu_custom_call.1} parent=1 // pred_check
      _
    $region43: #{tpu_custom_call.1} parent=1 // pred_check_branch
      %76 = sbr.rel (0) target = $region45
    $region44: #{tpu_custom_call.1} parent=1 // pred_region
      _
    $region45: #{tpu_custom_call.1} parent=1 // pred_fallthru
      _
    // Predicated region
    $region46: #{tpu_custom_call.1} parent=1 // pred_check
      _
    $region47: #{tpu_custom_call.1} parent=1 // pred_check_branch
      %78 = sbr.rel (0) target = $region49
    $region48: #{tpu_custom_call.1} parent=1 // pred_region
      _
    $region49: #{tpu_custom_call.1} parent=1 // pred_fallthru
      _
    // Predicated region
    $region50: #{tpu_custom_call.1} parent=1 // pred_check
      _
    $region51: #{tpu_custom_call.1} parent=1 // pred_check_branch
      %80 = sbr.rel (0) target = $region53
    $region52: #{tpu_custom_call.1} parent=1 // pred_region
      _
    $region53: #{tpu_custom_call.1} parent=1 // pred_fallthru
      _
    // Predicated region
    $region54: #{tpu_custom_call.1} parent=1 // pred_check
      _
    $region55: #{tpu_custom_call.1} parent=1 // pred_check_branch
      %82 = sbr.rel (0) target = $region57
    $region56: #{tpu_custom_call.1} parent=1 // pred_region
      _
    $region57: #{tpu_custom_call.1} parent=1 // pred_fallthru
      _
    // Predicated region
    $region58: #{tpu_custom_call.1} parent=1 // pred_check
      _
    $region59: #{tpu_custom_call.1} parent=1 // pred_check_branch
      %84 = sbr.rel (0) target = $region61
    $region60: #{tpu_custom_call.1} parent=1 // pred_region
      %85 = dma.done [#allocation3], 512
    $region61: #{tpu_custom_call.1} parent=1 // pred_fallthru
      _
    // Predicated region
    $region62: #{tpu_custom_call.1} parent=1 // pred_check
      _
    $region63: #{tpu_custom_call.1} parent=1 // pred_check_branch
      %87 = sbr.rel (0) target = $region65
    $region64: #{tpu_custom_call.1} parent=1 // pred_region
      %88 = dma.done [#allocation6], 32
    $region65: #{tpu_custom_call.1} parent=1 // pred_fallthru
      _
    // Predicated region
    $region66: #{tpu_custom_call.1} parent=1 // pred_check
      _
    $region67: #{tpu_custom_call.1} parent=1 // pred_check_branch
      %90 = sbr.rel (0) target = $region69
    $region68: #{tpu_custom_call.1} parent=1 // pred_region
      %91 = dma.done [#allocation6], 32
    $region69: #{tpu_custom_call.1} parent=1 // pred_fallthru
      _
    %v92 = vld [vmem:[%s0] sm:$0xff]
    %v93 = vlaneseq
    %v94 = vand.u32 %v93, 127
    %95 = vset.pattern.permute.xlu0 0
    %96 = vperm.xlu0 %95, %v92
    %v97 = vpop.permute.xlu0 %96
    %vm98 = vcmp.eq.s32.totalorder %v94, %v97
    %v99 = vsel %vm98, 1, 0
    %v100 = vcvt.s32.f32 %v99
    %v101 = vld [vmem:[#allocation2] sm:$0xff]
    %v102 = vld [vmem:[#allocation2 + $0x8] sm:$0xff]
    %v103 = vld [vmem:[#allocation2 + $0x10] sm:$0xff]
    %v104 = vld [vmem:[#allocation2 + $0x18] sm:$0xff]
    %vm105 = vcmask 261120
    %v107 = vsel %vm105, %v100, 0
    %109 = vmatprep.subr.mxu0 0.0
    %110 = vmatpush1.msra.mxu0 %v101
    %111 = vmatprep.subr.mxu0 0.0
    %112 = vmatpush1.msra.mxu0 %v102
    %113 = vmatprep.subr.mxu0 0.0
    %114 = vmatpush1.msra.mxu0 %v103
    %115 = vmatprep.subr.mxu0 0.0
    %116 = vmatpush1.msra.mxu0 %v104
    %117 = vmatprep.subr.mxu0 0.0
    %118 = vmatpush1.msra.mxu0 0.0
    %119 = vmatprep.subr.mxu0 0.0
    %120 = vmatpush1.msra.mxu0 0.0
    %121 = vmatprep.subr.mxu0 0.0
    %122 = vmatpush1.msra.mxu0 0.0
    %123 = vmatprep.subr.mxu0 0.0
    %124 = vmatpush1.msra.mxu0 0.0
    %125 = vmatprep.subr.mxu0 0.0
    %126 = vmatpush1.msra.mxu0 0.0
    %127 = vmatprep.subr.mxu0 0.0
    %128 = vmatpush1.msra.mxu0 0.0
    %129 = vmatprep.subr.mxu0 0.0
    %130 = vmatpush1.msra.mxu0 0.0
    %131 = vmatprep.subr.mxu0 0.0
    %132 = vmatpush1.msra.mxu0 0.0
    %133 = vmatprep.subr.mxu0 0.0
    %134 = vmatpush1.msra.mxu0 0.0
    %135 = vmatprep.subr.mxu0 0.0
    %136 = vmatpush1.msra.mxu0 0.0
    %137 = vmatprep.subr.mxu0 0.0
    %138 = vmatpush1.msra.mxu0 0.0
    %139 = vmatprep.subr.mxu0 0.0
    %140 = vmatpush1.msra.mxu0 0.0
    %141 = vmatprep.subr.mxu0 0.0
    %142 = vmatpush1.msra.mxu0 0.0
    %143 = vmatprep.subr.mxu0 0.0
    %144 = vmatpush1.msra.mxu0 0.0
    %145 = vmatprep.subr.mxu0 0.0
    %146 = vmatpush1.msra.mxu0 0.0
    %147 = vmatprep.subr.mxu0 0.0
    %148 = vmatpush1.msra.mxu0 0.0
    %149 = vmatprep.subr.mxu0 0.0
    %150 = vmatpush1.msra.mxu0 0.0
    %151 = vmatprep.subr.mxu0 0.0
    %152 = vmatpush1.msra.mxu0 0.0
    %153 = vmatprep.subr.mxu0 0.0
    %154 = vmatpush1.msra.mxu0 0.0
    %155 = vmatprep.subr.mxu0 0.0
    %156 = vmatpush1.msra.mxu0 0.0
    %157 = vmatprep.subr.mxu0 0.0
    %158 = vmatpush1.msra.mxu0 0.0
    %159 = vmatprep.subr.mxu0 0.0
    %160 = vmatpush1.msra.mxu0 0.0
    %161 = vmatprep.subr.mxu0 0.0
    %162 = vmatpush1.msra.mxu0 0.0
    %163 = vmatprep.subr.mxu0 0.0
    %164 = vmatpush1.msra.mxu0 0.0
    %165 = vmatprep.subr.mxu0 0.0
    %166 = vmatpush1.msra.mxu0 0.0
    %167 = vmatprep.subr.mxu0 0.0
    %168 = vmatpush1.msra.mxu0 0.0
    %169 = vmatprep.subr.mxu0 0.0
    %170 = vmatpush1.msra.mxu0 0.0
    %171 = vmatprep.subr.mxu0 0.0
    %172 = vmatpush1.msra.mxu0 0.0
    %173 = vmatprep.mubr.f32.mxu0 0.0
    %174 = vmatmul.mubr.f32.gmra.mrb[0].mxu0 %v107
    %v175 = vpop.f32.mrb[0].mxu0
    %v176 = vadd.f32 0.0, %v175
    %v177 = vpop.f32.mrb[0].mxu0
    %178 = vdwg.mxu0
    %v179 = vld [vmem:[%s2] sm:$0xff]
    %v180 = vld [vmem:[%s2 + $0x8] sm:$0xff]
    %v181 = vld [vmem:[%s2 + $0x10] sm:$0xff]
    %v182 = vld [vmem:[%s2 + $0x18] sm:$0xff]
    %v183 = vld [vmem:[%s3] sm:$0x1]
    %v185 = vlaneseq
    %v186 = vshrl.u32 %v185, 7
    %v187 = vsub.s32 0, %v186
    %v188 = vrot.slane %v183, %v187
    %v191 = vsel %vm105, %v176, 0
    %193 = vmatprep.subr.mxu0 0.0
    %194 = vmatpush1.msra.mxu0 %v179
    %195 = vmatprep.subr.mxu0 0.0
    %196 = vmatpush1.msra.mxu0 %v180
    %197 = vmatprep.subr.mxu0 0.0
    %198 = vmatpush1.msra.mxu0 %v181
    %199 = vmatprep.subr.mxu0 0.0
    %200 = vmatpush1.msra.mxu0 %v182
    %201 = vmatprep.subr.mxu0 0.0
    %202 = vmatpush1.msra.mxu0 0.0
    %203 = vmatprep.subr.mxu0 0.0
    %204 = vmatpush1.msra.mxu0 0.0
    %205 = vmatprep.subr.mxu0 0.0
    %206 = vmatpush1.msra.mxu0 0.0
    %207 = vmatprep.subr.mxu0 0.0
    %208 = vmatpush1.msra.mxu0 0.0
    %209 = vmatprep.subr.mxu0 0.0
    %210 = vmatpush1.msra.mxu0 0.0
    %211 = vmatprep.subr.mxu0 0.0
    %212 = vmatpush1.msra.mxu0 0.0
    %213 = vmatprep.subr.mxu0 0.0
    %214 = vmatpush1.msra.mxu0 0.0
    %215 = vmatprep.subr.mxu0 0.0
    %216 = vmatpush1.msra.mxu0 0.0
    %217 = vmatprep.subr.mxu0 0.0
    %218 = vmatpush1.msra.mxu0 0.0
    %219 = vmatprep.subr.mxu0 0.0
    %220 = vmatpush1.msra.mxu0 0.0
    %221 = vmatprep.subr.mxu0 0.0
    %222 = vmatpush1.msra.mxu0 0.0
    %223 = vmatprep.subr.mxu0 0.0
    %224 = vmatpush1.msra.mxu0 0.0
    %225 = vmatprep.subr.mxu0 0.0
    %226 = vmatpush1.msra.mxu0 0.0
    %227 = vmatprep.subr.mxu0 0.0
    %228 = vmatpush1.msra.mxu0 0.0
    %229 = vmatprep.subr.mxu0 0.0
    %230 = vmatpush1.msra.mxu0 0.0
    %231 = vmatprep.subr.mxu0 0.0
    %232 = vmatpush1.msra.mxu0 0.0
    %233 = vmatprep.subr.mxu0 0.0
    %234 = vmatpush1.msra.mxu0 0.0
    %235 = vmatprep.subr.mxu0 0.0
    %236 = vmatpush1.msra.mxu0 0.0
    %237 = vmatprep.subr.mxu0 0.0
    %238 = vmatpush1.msra.mxu0 0.0
    %239 = vmatprep.subr.mxu0 0.0
    %240 = vmatpush1.msra.mxu0 0.0
    %241 = vmatprep.subr.mxu0 0.0
    %242 = vmatpush1.msra.mxu0 0.0
    %243 = vmatprep.subr.mxu0 0.0
    %244 = vmatpush1.msra.mxu0 0.0
    %245 = vmatprep.subr.mxu0 0.0
    %246 = vmatpush1.msra.mxu0 0.0
    %247 = vmatprep.subr.mxu0 0.0
    %248 = vmatpush1.msra.mxu0 0.0
    %249 = vmatprep.subr.mxu0 0.0
    %250 = vmatpush1.msra.mxu0 0.0
    %251 = vmatprep.subr.mxu0 0.0
    %252 = vmatpush1.msra.mxu0 0.0
    %253 = vmatprep.subr.mxu0 0.0
    %254 = vmatpush1.msra.mxu0 0.0
    %255 = vmatprep.subr.mxu0 0.0
    %256 = vmatpush1.msra.mxu0 0.0
    %257 = vmatprep.mubr.f32.mxu0 0.0
    %258 = vmatmul.mubr.f32.gmra.mrb[0].mxu0 %v191
    %v259 = vpop.f32.mrb[0].mxu0
    %v260 = vadd.f32 %v188, %v259
    %v261 = vpop.f32.mrb[0].mxu0
    %262 = vdwg.mxu0
    %v263 = vld [vmem:[%s4] sm:$0xff]
    %v264 = vld [vmem:[%s4 + $0x8] sm:$0xff]
    %v265 = vld [vmem:[%s4 + $0x10] sm:$0xff]
    %v266 = vld [vmem:[%s4 + $0x18] sm:$0xff]
    %v267 = vld [vmem:[#allocation5] sm:$0x1]
    %v269 = vlaneseq
    %v270 = vshrl.u32 %v269, 7
    %v271 = vsub.s32 0, %v270
    %v272 = vrot.slane %v267, %v271
    %274 = vmatprep.subr.mxu0 0.0
    %275 = vmatpush1.msra.mxu0 %v263
    %276 = vmatprep.subr.mxu0 0.0
    %277 = vmatpush1.msra.mxu0 %v264
    %278 = vmatprep.subr.mxu0 0.0
    %279 = vmatpush1.msra.mxu0 %v265
    %280 = vmatprep.subr.mxu0 0.0
    %281 = vmatpush1.msra.mxu0 %v266
    %282 = vmatprep.subr.mxu0 0.0
    %283 = vmatpush1.msra.mxu0 0.0
    %284 = vmatprep.subr.mxu0 0.0
    %285 = vmatpush1.msra.mxu0 0.0
    %286 = vmatprep.subr.mxu0 0.0
    %287 = vmatpush1.msra.mxu0 0.0
    %288 = vmatprep.subr.mxu0 0.0
    %289 = vmatpush1.msra.mxu0 0.0
    %290 = vmatprep.subr.mxu0 0.0
    %291 = vmatpush1.msra.mxu0 0.0
    %292 = vmatprep.subr.mxu0 0.0
    %293 = vmatpush1.msra.mxu0 0.0
    %294 = vmatprep.subr.mxu0 0.0
    %295 = vmatpush1.msra.mxu0 0.0
    %296 = vmatprep.subr.mxu0 0.0
    %297 = vmatpush1.msra.mxu0 0.0
    %298 = vmatprep.subr.mxu0 0.0
    %299 = vmatpush1.msra.mxu0 0.0
    %300 = vmatprep.subr.mxu0 0.0
    %301 = vmatpush1.msra.mxu0 0.0
    %302 = vmatprep.subr.mxu0 0.0
    %303 = vmatpush1.msra.mxu0 0.0
    %304 = vmatprep.subr.mxu0 0.0
    %305 = vmatpush1.msra.mxu0 0.0
    %306 = vmatprep.subr.mxu0 0.0
    %307 = vmatpush1.msra.mxu0 0.0
    %308 = vmatprep.subr.mxu0 0.0
    %309 = vmatpush1.msra.mxu0 0.0
    %310 = vmatprep.subr.mxu0 0.0
    %311 = vmatpush1.msra.mxu0 0.0
    %312 = vmatprep.subr.mxu0 0.0
    %313 = vmatpush1.msra.mxu0 0.0
    %314 = vmatprep.subr.mxu0 0.0
    %315 = vmatpush1.msra.mxu0 0.0
    %316 = vmatprep.subr.mxu0 0.0
    %317 = vmatpush1.msra.mxu0 0.0
    %318 = vmatprep.subr.mxu0 0.0
    %319 = vmatpush1.msra.mxu0 0.0
    %320 = vmatprep.subr.mxu0 0.0
    %321 = vmatpush1.msra.mxu0 0.0
    %322 = vmatprep.subr.mxu0 0.0
    %323 = vmatpush1.msra.mxu0 0.0
    %324 = vmatprep.subr.mxu0 0.0
    %325 = vmatpush1.msra.mxu0 0.0
    %326 = vmatprep.subr.mxu0 0.0
    %327 = vmatpush1.msra.mxu0 0.0
    %328 = vmatprep.subr.mxu0 0.0
    %329 = vmatpush1.msra.mxu0 0.0
    %330 = vmatprep.subr.mxu0 0.0
    %331 = vmatpush1.msra.mxu0 0.0
    %332 = vmatprep.subr.mxu0 0.0
    %333 = vmatpush1.msra.mxu0 0.0
    %334 = vmatprep.subr.mxu0 0.0
    %335 = vmatpush1.msra.mxu0 0.0
    %336 = vmatprep.subr.mxu0 0.0
    %337 = vmatpush1.msra.mxu0 0.0
    %338 = vmatprep.mubr.f32.mxu0 0.0
    %339 = vmatmul.mubr.f32.gmra.mrb[0].mxu0 %v191
    %v340 = vpop.f32.mrb[0].mxu0
    %v341 = vadd.f32 %v272, %v340
    %v342 = vpop.f32.mrb[0].mxu0
    %343 = vdwg.mxu0
    %v344 = vld [vmem:[%s6] sm:$0xff]
    %v345 = vld [vmem:[%s6 + $0x8] sm:$0xff]
    %v346 = vld [vmem:[%s6 + $0x10] sm:$0xff]
    %v347 = vld [vmem:[%s6 + $0x18] sm:$0xff]
    %v348 = vld [vmem:[#allocation7] sm:$0x1]
    %v350 = vlaneseq
    %v351 = vshrl.u32 %v350, 7
    %v352 = vsub.s32 0, %v351
    %v353 = vrot.slane %v348, %v352
    %355 = vmatprep.subr.mxu0 0.0
    %356 = vmatpush1.msra.mxu0 %v344
    %357 = vmatprep.subr.mxu0 0.0
    %358 = vmatpush1.msra.mxu0 %v345
    %359 = vmatprep.subr.mxu0 0.0
    %360 = vmatpush1.msra.mxu0 %v346
    %361 = vmatprep.subr.mxu0 0.0
    %362 = vmatpush1.msra.mxu0 %v347
    %363 = vmatprep.subr.mxu0 0.0
    %364 = vmatpush1.msra.mxu0 0.0
    %365 = vmatprep.subr.mxu0 0.0
    %366 = vmatpush1.msra.mxu0 0.0
    %367 = vmatprep.subr.mxu0 0.0
    %368 = vmatpush1.msra.mxu0 0.0
    %369 = vmatprep.subr.mxu0 0.0
    %370 = vmatpush1.msra.mxu0 0.0
    %371 = vmatprep.subr.mxu0 0.0
    %372 = vmatpush1.msra.mxu0 0.0
    %373 = vmatprep.subr.mxu0 0.0
    %374 = vmatpush1.msra.mxu0 0.0
    %375 = vmatprep.subr.mxu0 0.0
    %376 = vmatpush1.msra.mxu0 0.0
    %377 = vmatprep.subr.mxu0 0.0
    %378 = vmatpush1.msra.mxu0 0.0
    %379 = vmatprep.subr.mxu0 0.0
    %380 = vmatpush1.msra.mxu0 0.0
    %381 = vmatprep.subr.mxu0 0.0
    %382 = vmatpush1.msra.mxu0 0.0
    %383 = vmatprep.subr.mxu0 0.0
    %384 = vmatpush1.msra.mxu0 0.0
    %385 = vmatprep.subr.mxu0 0.0
    %386 = vmatpush1.msra.mxu0 0.0
    %387 = vmatprep.subr.mxu0 0.0
    %388 = vmatpush1.msra.mxu0 0.0
    %389 = vmatprep.subr.mxu0 0.0
    %390 = vmatpush1.msra.mxu0 0.0
    %391 = vmatprep.subr.mxu0 0.0
    %392 = vmatpush1.msra.mxu0 0.0
    %393 = vmatprep.subr.mxu0 0.0
    %394 = vmatpush1.msra.mxu0 0.0
    %395 = vmatprep.subr.mxu0 0.0
    %396 = vmatpush1.msra.mxu0 0.0
    %397 = vmatprep.subr.mxu0 0.0
    %398 = vmatpush1.msra.mxu0 0.0
    %399 = vmatprep.subr.mxu0 0.0
    %400 = vmatpush1.msra.mxu0 0.0
    %401 = vmatprep.subr.mxu0 0.0
    %402 = vmatpush1.msra.mxu0 0.0
    %403 = vmatprep.subr.mxu0 0.0
    %404 = vmatpush1.msra.mxu0 0.0
    %405 = vmatprep.subr.mxu0 0.0
    %406 = vmatpush1.msra.mxu0 0.0
    %407 = vmatprep.subr.mxu0 0.0
    %408 = vmatpush1.msra.mxu0 0.0
    %409 = vmatprep.subr.mxu0 0.0
    %410 = vmatpush1.msra.mxu0 0.0
    %411 = vmatprep.subr.mxu0 0.0
    %412 = vmatpush1.msra.mxu0 0.0
    %413 = vmatprep.subr.mxu0 0.0
    %414 = vmatpush1.msra.mxu0 0.0
    %415 = vmatprep.subr.mxu0 0.0
    %416 = vmatpush1.msra.mxu0 0.0
    %417 = vmatprep.subr.mxu0 0.0
    %418 = vmatpush1.msra.mxu0 0.0
    %419 = vmatprep.mubr.f32.mxu0 0.0
    %420 = vmatmul.mubr.f32.gmra.mrb[0].mxu0 %v191
    %v421 = vpop.f32.mrb[0].mxu0
    %v422 = vadd.f32 %v353, %v421
    %v423 = vpop.f32.mrb[0].mxu0
    %424 = vdwg.mxu0
    %vm425 = vcmask 130048
    %v427 = vsel %vm425, %v260, 0
    %v430 = vsel %vm425, %v341, 0
    %432 = vmatprep.subr.mxu0 0.0
    %433 = vmatpush1.xpose.msra.mxu0 %v430
    %434 = vmatprep.subr.mxu0 0.0
    %435 = vmatpush1.xpose.msra.mxu0 0.0
    %436 = vmatprep.subr.mxu0 0.0
    %437 = vmatpush1.xpose.msra.mxu0 0.0
    %438 = vmatprep.subr.mxu0 0.0
    %439 = vmatpush1.xpose.msra.mxu0 0.0
    %440 = vmatprep.subr.mxu0 0.0
    %441 = vmatpush1.xpose.msra.mxu0 0.0
    %442 = vmatprep.subr.mxu0 0.0
    %443 = vmatpush1.xpose.msra.mxu0 0.0
    %444 = vmatprep.subr.mxu0 0.0
    %445 = vmatpush1.xpose.msra.mxu0 0.0
    %446 = vmatprep.subr.mxu0 0.0
    %447 = vmatpush1.xpose.msra.mxu0 0.0
    %448 = vmatprep.subr.mxu0 0.0
    %449 = vmatpush1.xpose.msra.mxu0 0.0
    %450 = vmatprep.subr.mxu0 0.0
    %451 = vmatpush1.xpose.msra.mxu0 0.0
    %452 = vmatprep.subr.mxu0 0.0
    %453 = vmatpush1.xpose.msra.mxu0 0.0
    %454 = vmatprep.subr.mxu0 0.0
    %455 = vmatpush1.xpose.msra.mxu0 0.0
    %456 = vmatprep.subr.mxu0 0.0
    %457 = vmatpush1.xpose.msra.mxu0 0.0
    %458 = vmatprep.subr.mxu0 0.0
    %459 = vmatpush1.xpose.msra.mxu0 0.0
    %460 = vmatprep.subr.mxu0 0.0
    %461 = vmatpush1.xpose.msra.mxu0 0.0
    %462 = vmatprep.subr.mxu0 0.0
    %463 = vmatpush1.xpose.msra.mxu0 0.0
    %464 = vmatprep.subr.mxu0 0.0
    %465 = vmatpush1.xpose.msra.mxu0 0.0
    %466 = vmatprep.subr.mxu0 0.0
    %467 = vmatpush1.xpose.msra.mxu0 0.0
    %468 = vmatprep.subr.mxu0 0.0
    %469 = vmatpush1.xpose.msra.mxu0 0.0
    %470 = vmatprep.subr.mxu0 0.0
    %471 = vmatpush1.xpose.msra.mxu0 0.0
    %472 = vmatprep.subr.mxu0 0.0
    %473 = vmatpush1.xpose.msra.mxu0 0.0
    %474 = vmatprep.subr.mxu0 0.0
    %475 = vmatpush1.xpose.msra.mxu0 0.0
    %476 = vmatprep.subr.mxu0 0.0
    %477 = vmatpush1.xpose.msra.mxu0 0.0
    %478 = vmatprep.subr.mxu0 0.0
    %479 = vmatpush1.xpose.msra.mxu0 0.0
    %480 = vmatprep.subr.mxu0 0.0
    %481 = vmatpush1.xpose.msra.mxu0 0.0
    %482 = vmatprep.subr.mxu0 0.0
    %483 = vmatpush1.xpose.msra.mxu0 0.0
    %484 = vmatprep.subr.mxu0 0.0
    %485 = vmatpush1.xpose.msra.mxu0 0.0
    %486 = vmatprep.subr.mxu0 0.0
    %487 = vmatpush1.xpose.msra.mxu0 0.0
    %488 = vmatprep.subr.mxu0 0.0
    %489 = vmatpush1.xpose.msra.mxu0 0.0
    %490 = vmatprep.subr.mxu0 0.0
    %491 = vmatpush1.xpose.msra.mxu0 0.0
    %492 = vmatprep.subr.mxu0 0.0
    %493 = vmatpush1.xpose.msra.mxu0 0.0
    %494 = vmatprep.subr.mxu0 0.0
    %495 = vmatpush1.xpose.msra.mxu0 0.0
    %496 = vmatprep.mubr.f32.mxu0 0.0
    %497 = vmatmul.mubr.f32.gmra.mrb[0].mxu0 %v427
    %v498 = vpop.f32.mrb[0].mxu0
    %v499 = vadd.f32 0.0, %v498
    %v500 = vpop.f32.mrb[0].mxu0
    %501 = vdwg.mxu0
    %vm502 = vcmask 64512
    %v503 = vsel %vm502, %v499, -inf
    %504 = vmax.xlane.f32.xlu0 %v503
    %v505 = vpop.xlane.xlu0 %504
    %v506 = vsub.f32 %v499, %v505
    %v507 = vmul.f32 %v506, 1.442695
    %v508 = vpow.pop %v507
    %v509 = vsel %vm502, %v508, 0.0
    %510 = vadd.xlane.f32.xlu0 %v509
    %v511 = vpop.xlane.xlu0 %510
    %v512 = vrcp.pop %v511
    %v513 = vmul.f32 %v508, %v512
    %v514 = vsel %vm502, %v513, 0.0
    %515 = vst [vmem:[#allocation9] sm:$0xff] %v514
    %v517 = vsel %vm502, %v513, 0
    %519 = vmatprep.subr.mxu0 0.0
    %520 = vmatpush1.msra.mxu0 %v422
    %521 = vmatprep.subr.mxu0 0.0
    %522 = vmatpush1.msra.mxu0 0.0
    %523 = vmatprep.subr.mxu0 0.0
    %524 = vmatpush1.msra.mxu0 0.0
    %525 = vmatprep.subr.mxu0 0.0
    %526 = vmatpush1.msra.mxu0 0.0
    %527 = vmatprep.subr.mxu0 0.0
    %528 = vmatpush1.msra.mxu0 0.0
    %529 = vmatprep.subr.mxu0 0.0
    %530 = vmatpush1.msra.mxu0 0.0
    %531 = vmatprep.subr.mxu0 0.0
    %532 = vmatpush1.msra.mxu0 0.0
    %533 = vmatprep.subr.mxu0 0.0
    %534 = vmatpush1.msra.mxu0 0.0
    %535 = vmatprep.subr.mxu0 0.0
    %536 = vmatpush1.msra.mxu0 0.0
    %537 = vmatprep.subr.mxu0 0.0
    %538 = vmatpush1.msra.mxu0 0.0
    %539 = vmatprep.subr.mxu0 0.0
    %540 = vmatpush1.msra.mxu0 0.0
    %541 = vmatprep.subr.mxu0 0.0
    %542 = vmatpush1.msra.mxu0 0.0
    %543 = vmatprep.subr.mxu0 0.0
    %544 = vmatpush1.msra.mxu0 0.0
    %545 = vmatprep.subr.mxu0 0.0
    %546 = vmatpush1.msra.mxu0 0.0
    %547 = vmatprep.subr.mxu0 0.0
    %548 = vmatpush1.msra.mxu0 0.0
    %549 = vmatprep.subr.mxu0 0.0
    %550 = vmatpush1.msra.mxu0 0.0
    %551 = vmatprep.subr.mxu0 0.0
    %552 = vmatpush1.msra.mxu0 0.0
    %553 = vmatprep.subr.mxu0 0.0
    %554 = vmatpush1.msra.mxu0 0.0
    %555 = vmatprep.subr.mxu0 0.0
    %556 = vmatpush1.msra.mxu0 0.0
    %557 = vmatprep.subr.mxu0 0.0
    %558 = vmatpush1.msra.mxu0 0.0
    %559 = vmatprep.subr.mxu0 0.0
    %560 = vmatpush1.msra.mxu0 0.0
    %561 = vmatprep.subr.mxu0 0.0
    %562 = vmatpush1.msra.mxu0 0.0
    %563 = vmatprep.subr.mxu0 0.0
    %564 = vmatpush1.msra.mxu0 0.0
    %565 = vmatprep.subr.mxu0 0.0
    %566 = vmatpush1.msra.mxu0 0.0
    %567 = vmatprep.subr.mxu0 0.0
    %568 = vmatpush1.msra.mxu0 0.0
    %569 = vmatprep.subr.mxu0 0.0
    %570 = vmatpush1.msra.mxu0 0.0
    %571 = vmatprep.subr.mxu0 0.0
    %572 = vmatpush1.msra.mxu0 0.0
    %573 = vmatprep.subr.mxu0 0.0
    %574 = vmatpush1.msra.mxu0 0.0
    %575 = vmatprep.subr.mxu0 0.0
    %576 = vmatpush1.msra.mxu0 0.0
    %577 = vmatprep.subr.mxu0 0.0
    %578 = vmatpush1.msra.mxu0 0.0
    %579 = vmatprep.subr.mxu0 0.0
    %580 = vmatpush1.msra.mxu0 0.0
    %581 = vmatprep.subr.mxu0 0.0
    %582 = vmatpush1.msra.mxu0 0.0
    %583 = vmatprep.mubr.f32.mxu0 0.0
    %584 = vmatmul.mubr.f32.gmra.mrb[0].mxu0 %v517
    %v585 = vpop.f32.mrb[0].mxu0
    %v586 = vadd.f32 %v176, %v585
    %v587 = vpop.f32.mrb[0].mxu0
    %588 = vdwg.mxu0
    %v589 = vld [vmem:[%s8] sm:$0xff]
    %v590 = vld [vmem:[%s8 + $0x8] sm:$0xff]
    %v591 = vld [vmem:[%s8 + $0x10] sm:$0xff]
    %v592 = vld [vmem:[%s8 + $0x18] sm:$0xff]
    %v593 = vld [vmem:[%s9] sm:$0x1]
    %v595 = vlaneseq
    %v596 = vshrl.u32 %v595, 7
    %v597 = vsub.s32 0, %v596
    %v598 = vrot.slane %v593, %v597
    %v601 = vsel %vm105, %v586, 0
    %603 = vmatprep.subr.mxu0 0.0
    %604 = vmatpush1.msra.mxu0 %v589
    %605 = vmatprep.subr.mxu0 0.0
    %606 = vmatpush1.msra.mxu0 %v590
    %607 = vmatprep.subr.mxu0 0.0
    %608 = vmatpush1.msra.mxu0 %v591
    %609 = vmatprep.subr.mxu0 0.0
    %610 = vmatpush1.msra.mxu0 %v592
    %611 = vmatprep.subr.mxu0 0.0
    %612 = vmatpush1.msra.mxu0 0.0
    %613 = vmatprep.subr.mxu0 0.0
    %614 = vmatpush1.msra.mxu0 0.0
    %615 = vmatprep.subr.mxu0 0.0
    %616 = vmatpush1.msra.mxu0 0.0
    %617 = vmatprep.subr.mxu0 0.0
    %618 = vmatpush1.msra.mxu0 0.0
    %619 = vmatprep.subr.mxu0 0.0
    %620 = vmatpush1.msra.mxu0 0.0
    %621 = vmatprep.subr.mxu0 0.0
    %622 = vmatpush1.msra.mxu0 0.0
    %623 = vmatprep.subr.mxu0 0.0
    %624 = vmatpush1.msra.mxu0 0.0
    %625 = vmatprep.subr.mxu0 0.0
    %626 = vmatpush1.msra.mxu0 0.0
    %627 = vmatprep.subr.mxu0 0.0
    %628 = vmatpush1.msra.mxu0 0.0
    %629 = vmatprep.subr.mxu0 0.0
    %630 = vmatpush1.msra.mxu0 0.0
    %631 = vmatprep.subr.mxu0 0.0
    %632 = vmatpush1.msra.mxu0 0.0
    %633 = vmatprep.subr.mxu0 0.0
    %634 = vmatpush1.msra.mxu0 0.0
    %635 = vmatprep.subr.mxu0 0.0
    %636 = vmatpush1.msra.mxu0 0.0
    %637 = vmatprep.subr.mxu0 0.0
    %638 = vmatpush1.msra.mxu0 0.0
    %639 = vmatprep.subr.mxu0 0.0
    %640 = vmatpush1.msra.mxu0 0.0
    %641 = vmatprep.subr.mxu0 0.0
    %642 = vmatpush1.msra.mxu0 0.0
    %643 = vmatprep.subr.mxu0 0.0
    %644 = vmatpush1.msra.mxu0 0.0
    %645 = vmatprep.subr.mxu0 0.0
    %646 = vmatpush1.msra.mxu0 0.0
    %647 = vmatprep.subr.mxu0 0.0
    %648 = vmatpush1.msra.mxu0 0.0
    %649 = vmatprep.subr.mxu0 0.0
    %650 = vmatpush1.msra.mxu0 0.0
    %651 = vmatprep.subr.mxu0 0.0
    %652 = vmatpush1.msra.mxu0 0.0
    %653 = vmatprep.subr.mxu0 0.0
    %654 = vmatpush1.msra.mxu0 0.0
    %655 = vmatprep.subr.mxu0 0.0
    %656 = vmatpush1.msra.mxu0 0.0
    %657 = vmatprep.subr.mxu0 0.0
    %658 = vmatpush1.msra.mxu0 0.0
    %659 = vmatprep.subr.mxu0 0.0
    %660 = vmatpush1.msra.mxu0 0.0
    %661 = vmatprep.subr.mxu0 0.0
    %662 = vmatpush1.msra.mxu0 0.0
    %663 = vmatprep.subr.mxu0 0.0
    %664 = vmatpush1.msra.mxu0 0.0
    %665 = vmatprep.subr.mxu0 0.0
    %666 = vmatpush1.msra.mxu0 0.0
    %667 = vmatprep.mubr.f32.mxu0 0.0
    %668 = vmatmul.mubr.f32.gmra.mrb[0].mxu0 %v601
    %v669 = vpop.f32.mrb[0].mxu0
    %v670 = vadd.f32 %v598, %v669
    %v671 = vpop.f32.mrb[0].mxu0
    %672 = vdwg.mxu0
    %v673 = vmax.f32 %v670, 0.0
    %v674 = vld [vmem:[%s10] sm:$0xff]
    %v675 = vld [vmem:[%s10 + $0x8] sm:$0xff]
    %v676 = vld [vmem:[%s10 + $0x10] sm:$0xff]
    %v677 = vld [vmem:[%s10 + $0x18] sm:$0xff]
    %v678 = vld [vmem:[%s11] sm:$0x1]
    %v680 = vlaneseq
    %v681 = vshrl.u32 %v680, 7
    %v682 = vsub.s32 0, %v681
    %v683 = vrot.slane %v678, %v682
    %v686 = vsel %vm105, %v673, 0
    %688 = vmatprep.subr.mxu0 0.0
    %689 = vmatpush1.msra.mxu0 %v674
    %690 = vmatprep.subr.mxu0 0.0
    %691 = vmatpush1.msra.mxu0 %v675
    %692 = vmatprep.subr.mxu0 0.0
    %693 = vmatpush1.msra.mxu0 %v676
    %694 = vmatprep.subr.mxu0 0.0
    %695 = vmatpush1.msra.mxu0 %v677
    %696 = vmatprep.subr.mxu0 0.0
    %697 = vmatpush1.msra.mxu0 0.0
    %698 = vmatprep.subr.mxu0 0.0
    %699 = vmatpush1.msra.mxu0 0.0
    %700 = vmatprep.subr.mxu0 0.0
    %701 = vmatpush1.msra.mxu0 0.0
    %702 = vmatprep.subr.mxu0 0.0
    %703 = vmatpush1.msra.mxu0 0.0
    %704 = vmatprep.subr.mxu0 0.0
    %705 = vmatpush1.msra.mxu0 0.0
    %706 = vmatprep.subr.mxu0 0.0
    %707 = vmatpush1.msra.mxu0 0.0
    %708 = vmatprep.subr.mxu0 0.0
    %709 = vmatpush1.msra.mxu0 0.0
    %710 = vmatprep.subr.mxu0 0.0
    %711 = vmatpush1.msra.mxu0 0.0
    %712 = vmatprep.subr.mxu0 0.0
    %713 = vmatpush1.msra.mxu0 0.0
    %714 = vmatprep.subr.mxu0 0.0
    %715 = vmatpush1.msra.mxu0 0.0
    %716 = vmatprep.subr.mxu0 0.0
    %717 = vmatpush1.msra.mxu0 0.0
    %718 = vmatprep.subr.mxu0 0.0
    %719 = vmatpush1.msra.mxu0 0.0
    %720 = vmatprep.subr.mxu0 0.0
    %721 = vmatpush1.msra.mxu0 0.0
    %722 = vmatprep.subr.mxu0 0.0
    %723 = vmatpush1.msra.mxu0 0.0
    %724 = vmatprep.subr.mxu0 0.0
    %725 = vmatpush1.msra.mxu0 0.0
    %726 = vmatprep.subr.mxu0 0.0
    %727 = vmatpush1.msra.mxu0 0.0
    %728 = vmatprep.subr.mxu0 0.0
    %729 = vmatpush1.msra.mxu0 0.0
    %730 = vmatprep.subr.mxu0 0.0
    %731 = vmatpush1.msra.mxu0 0.0
    %732 = vmatprep.subr.mxu0 0.0
    %733 = vmatpush1.msra.mxu0 0.0
    %734 = vmatprep.subr.mxu0 0.0
    %735 = vmatpush1.msra.mxu0 0.0
    %736 = vmatprep.subr.mxu0 0.0
    %737 = vmatpush1.msra.mxu0 0.0
    %738 = vmatprep.subr.mxu0 0.0
    %739 = vmatpush1.msra.mxu0 0.0
    %740 = vmatprep.subr.mxu0 0.0
    %741 = vmatpush1.msra.mxu0 0.0
    %742 = vmatprep.subr.mxu0 0.0
    %743 = vmatpush1.msra.mxu0 0.0
    %744 = vmatprep.subr.mxu0 0.0
    %745 = vmatpush1.msra.mxu0 0.0
    %746 = vmatprep.subr.mxu0 0.0
    %747 = vmatpush1.msra.mxu0 0.0
    %748 = vmatprep.subr.mxu0 0.0
    %749 = vmatpush1.msra.mxu0 0.0
    %750 = vmatprep.subr.mxu0 0.0
    %751 = vmatpush1.msra.mxu0 0.0
    %752 = vmatprep.mubr.f32.mxu0 0.0
    %753 = vmatmul.mubr.f32.gmra.mrb[0].mxu0 %v686
    %v754 = vpop.f32.mrb[0].mxu0
    %v755 = vadd.f32 %v683, %v754
    %v756 = vpop.f32.mrb[0].mxu0
    %757 = vdwg.mxu0
    %v758 = vadd.f32 %v755, %v586
    %s759 = scalar_lea.vmem %s2, 32
    %v760 = vld [vmem:[%s759] sm:$0xff]
    %v761 = vld [vmem:[%s759 + $0x8] sm:$0xff]
    %v762 = vld [vmem:[%s759 + $0x10] sm:$0xff]
    %v763 = vld [vmem:[%s759 + $0x18] sm:$0xff]
    %s764 = scalar_lea.vmem %s3, 1
    %v765 = vld [vmem:[%s764] sm:$0x1]
    %v767 = vlaneseq
    %v768 = vshrl.u32 %v767, 7
    %v769 = vsub.s32 0, %v768
    %v770 = vrot.slane %v765, %v769
    %v773 = vsel %vm105, %v758, 0
    %775 = vmatprep.subr.mxu0 0.0
    %776 = vmatpush1.msra.mxu0 %v760
    %777 = vmatprep.subr.mxu0 0.0
    %778 = vmatpush1.msra.mxu0 %v761
    %779 = vmatprep.subr.mxu0 0.0
    %780 = vmatpush1.msra.mxu0 %v762
    %781 = vmatprep.subr.mxu0 0.0
    %782 = vmatpush1.msra.mxu0 %v763
    %783 = vmatprep.subr.mxu0 0.0
    %784 = vmatpush1.msra.mxu0 0.0
    %785 = vmatprep.subr.mxu0 0.0
    %786 = vmatpush1.msra.mxu0 0.0
    %787 = vmatprep.subr.mxu0 0.0
    %788 = vmatpush1.msra.mxu0 0.0
    %789 = vmatprep.subr.mxu0 0.0
    %790 = vmatpush1.msra.mxu0 0.0
    %791 = vmatprep.subr.mxu0 0.0
    %792 = vmatpush1.msra.mxu0 0.0
    %793 = vmatprep.subr.mxu0 0.0
    %794 = vmatpush1.msra.mxu0 0.0
    %795 = vmatprep.subr.mxu0 0.0
    %796 = vmatpush1.msra.mxu0 0.0
    %797 = vmatprep.subr.mxu0 0.0
    %798 = vmatpush1.msra.mxu0 0.0
    %799 = vmatprep.subr.mxu0 0.0
    %800 = vmatpush1.msra.mxu0 0.0
    %801 = vmatprep.subr.mxu0 0.0
    %802 = vmatpush1.msra.mxu0 0.0
    %803 = vmatprep.subr.mxu0 0.0
    %804 = vmatpush1.msra.mxu0 0.0
    %805 = vmatprep.subr.mxu0 0.0
    %806 = vmatpush1.msra.mxu0 0.0
    %807 = vmatprep.subr.mxu0 0.0
    %808 = vmatpush1.msra.mxu0 0.0
    %809 = vmatprep.subr.mxu0 0.0
    %810 = vmatpush1.msra.mxu0 0.0
    %811 = vmatprep.subr.mxu0 0.0
    %812 = vmatpush1.msra.mxu0 0.0
    %813 = vmatprep.subr.mxu0 0.0
    %814 = vmatpush1.msra.mxu0 0.0
    %815 = vmatprep.subr.mxu0 0.0
    %816 = vmatpush1.msra.mxu0 0.0
    %817 = vmatprep.subr.mxu0 0.0
    %818 = vmatpush1.msra.mxu0 0.0
    %819 = vmatprep.subr.mxu0 0.0
    %820 = vmatpush1.msra.mxu0 0.0
    %821 = vmatprep.subr.mxu0 0.0
    %822 = vmatpush1.msra.mxu0 0.0
    %823 = vmatprep.subr.mxu0 0.0
    %824 = vmatpush1.msra.mxu0 0.0
    %825 = vmatprep.subr.mxu0 0.0
    %826 = vmatpush1.msra.mxu0 0.0
    %827 = vmatprep.subr.mxu0 0.0
    %828 = vmatpush1.msra.mxu0 0.0
    %829 = vmatprep.subr.mxu0 0.0
    %830 = vmatpush1.msra.mxu0 0.0
    %831 = vmatprep.subr.mxu0 0.0
    %832 = vmatpush1.msra.mxu0 0.0
    %833 = vmatprep.subr.mxu0 0.0
    %834 = vmatpush1.msra.mxu0 0.0
    %835 = vmatprep.subr.mxu0 0.0
    %836 = vmatpush1.msra.mxu0 0.0
    %837 = vmatprep.subr.mxu0 0.0
    %838 = vmatpush1.msra.mxu0 0.0
    %839 = vmatprep.mubr.f32.mxu0 0.0
    %840 = vmatmul.mubr.f32.gmra.mrb[0].mxu0 %v773
    %v841 = vpop.f32.mrb[0].mxu0
    %v842 = vadd.f32 %v770, %v841
    %v843 = vpop.f32.mrb[0].mxu0
    %844 = vdwg.mxu0
    %s845 = scalar_lea.vmem %s4, 32
    %v846 = vld [vmem:[%s845] sm:$0xff]
    %v847 = vld [vmem:[%s845 + $0x8] sm:$0xff]
    %v848 = vld [vmem:[%s845 + $0x10] sm:$0xff]
    %v849 = vld [vmem:[%s845 + $0x18] sm:$0xff]
    %s850 = scalar_lea.vmem [#allocation5], 1
    %v851 = vld [vmem:[%s850] sm:$0x1]
    %v853 = vlaneseq
    %v854 = vshrl.u32 %v853, 7
    %v855 = vsub.s32 0, %v854
    %v856 = vrot.slane %v851, %v855
    %858 = vmatprep.subr.mxu0 0.0
    %859 = vmatpush1.msra.mxu0 %v846
    %860 = vmatprep.subr.mxu0 0.0
    %861 = vmatpush1.msra.mxu0 %v847
    %862 = vmatprep.subr.mxu0 0.0
    %863 = vmatpush1.msra.mxu0 %v848
    %864 = vmatprep.subr.mxu0 0.0
    %865 = vmatpush1.msra.mxu0 %v849
    %866 = vmatprep.subr.mxu0 0.0
    %867 = vmatpush1.msra.mxu0 0.0
    %868 = vmatprep.subr.mxu0 0.0
    %869 = vmatpush1.msra.mxu0 0.0
    %870 = vmatprep.subr.mxu0 0.0
    %871 = vmatpush1.msra.mxu0 0.0
    %872 = vmatprep.subr.mxu0 0.0
    %873 = vmatpush1.msra.mxu0 0.0
    %874 = vmatprep.subr.mxu0 0.0
    %875 = vmatpush1.msra.mxu0 0.0
    %876 = vmatprep.subr.mxu0 0.0
    %877 = vmatpush1.msra.mxu0 0.0
    %878 = vmatprep.subr.mxu0 0.0
    %879 = vmatpush1.msra.mxu0 0.0
    %880 = vmatprep.subr.mxu0 0.0
    %881 = vmatpush1.msra.mxu0 0.0
    %882 = vmatprep.subr.mxu0 0.0
    %883 = vmatpush1.msra.mxu0 0.0
    %884 = vmatprep.subr.mxu0 0.0
    %885 = vmatpush1.msra.mxu0 0.0
    %886 = vmatprep.subr.mxu0 0.0
    %887 = vmatpush1.msra.mxu0 0.0
    %888 = vmatprep.subr.mxu0 0.0
    %889 = vmatpush1.msra.mxu0 0.0
    %890 = vmatprep.subr.mxu0 0.0
    %891 = vmatpush1.msra.mxu0 0.0
    %892 = vmatprep.subr.mxu0 0.0
    %893 = vmatpush1.msra.mxu0 0.0
    %894 = vmatprep.subr.mxu0 0.0
    %895 = vmatpush1.msra.mxu0 0.0
    %896 = vmatprep.subr.mxu0 0.0
    %897 = vmatpush1.msra.mxu0 0.0
    %898 = vmatprep.subr.mxu0 0.0
    %899 = vmatpush1.msra.mxu0 0.0
    %900 = vmatprep.subr.mxu0 0.0
    %901 = vmatpush1.msra.mxu0 0.0
    %902 = vmatprep.subr.mxu0 0.0
    %903 = vmatpush1.msra.mxu0 0.0
    %904 = vmatprep.subr.mxu0 0.0
    %905 = vmatpush1.msra.mxu0 0.0
    %906 = vmatprep.subr.mxu0 0.0
    %907 = vmatpush1.msra.mxu0 0.0
    %908 = vmatprep.subr.mxu0 0.0
    %909 = vmatpush1.msra.mxu0 0.0
    %910 = vmatprep.subr.mxu0 0.0
    %911 = vmatpush1.msra.mxu0 0.0
    %912 = vmatprep.subr.mxu0 0.0
    %913 = vmatpush1.msra.mxu0 0.0
    %914 = vmatprep.subr.mxu0 0.0
    %915 = vmatpush1.msra.mxu0 0.0
    %916 = vmatprep.subr.mxu0 0.0
    %917 = vmatpush1.msra.mxu0 0.0
    %918 = vmatprep.subr.mxu0 0.0
    %919 = vmatpush1.msra.mxu0 0.0
    %920 = vmatprep.subr.mxu0 0.0
    %921 = vmatpush1.msra.mxu0 0.0
    %922 = vmatprep.mubr.f32.mxu0 0.0
    %923 = vmatmul.mubr.f32.gmra.mrb[0].mxu0 %v773
    %v924 = vpop.f32.mrb[0].mxu0
    %v925 = vadd.f32 %v856, %v924
    %v926 = vpop.f32.mrb[0].mxu0
    %927 = vdwg.mxu0
    %s928 = scalar_lea.vmem %s6, 32
    %v929 = vld [vmem:[%s928] sm:$0xff]
    %v930 = vld [vmem:[%s928 + $0x8] sm:$0xff]
    %v931 = vld [vmem:[%s928 + $0x10] sm:$0xff]
    %v932 = vld [vmem:[%s928 + $0x18] sm:$0xff]
    %s933 = scalar_lea.vmem [#allocation7], 1
    %v934 = vld [vmem:[%s933] sm:$0x1]
    %v936 = vlaneseq
    %v937 = vshrl.u32 %v936, 7
    %v938 = vsub.s32 0, %v937
    %v939 = vrot.slane %v934, %v938
    %941 = vmatprep.subr.mxu0 0.0
    %942 = vmatpush1.msra.mxu0 %v929
    %943 = vmatprep.subr.mxu0 0.0
    %944 = vmatpush1.msra.mxu0 %v930
    %945 = vmatprep.subr.mxu0 0.0
    %946 = vmatpush1.msra.mxu0 %v931
    %947 = vmatprep.subr.mxu0 0.0
    %948 = vmatpush1.msra.mxu0 %v932
    %949 = vmatprep.subr.mxu0 0.0
    %950 = vmatpush1.msra.mxu0 0.0
    %951 = vmatprep.subr.mxu0 0.0
    %952 = vmatpush1.msra.mxu0 0.0
    %953 = vmatprep.subr.mxu0 0.0
    %954 = vmatpush1.msra.mxu0 0.0
    %955 = vmatprep.subr.mxu0 0.0
    %956 = vmatpush1.msra.mxu0 0.0
    %957 = vmatprep.subr.mxu0 0.0
    %958 = vmatpush1.msra.mxu0 0.0
    %959 = vmatprep.subr.mxu0 0.0
    %960 = vmatpush1.msra.mxu0 0.0
    %961 = vmatprep.subr.mxu0 0.0
    %962 = vmatpush1.msra.mxu0 0.0
    %963 = vmatprep.subr.mxu0 0.0
    %964 = vmatpush1.msra.mxu0 0.0
    %965 = vmatprep.subr.mxu0 0.0
    %966 = vmatpush1.msra.mxu0 0.0
    %967 = vmatprep.subr.mxu0 0.0
    %968 = vmatpush1.msra.mxu0 0.0
    %969 = vmatprep.subr.mxu0 0.0
    %970 = vmatpush1.msra.mxu0 0.0
    %971 = vmatprep.subr.mxu0 0.0
    %972 = vmatpush1.msra.mxu0 0.0
    %973 = vmatprep.subr.mxu0 0.0
    %974 = vmatpush1.msra.mxu0 0.0
    %975 = vmatprep.subr.mxu0 0.0
    %976 = vmatpush1.msra.mxu0 0.0
    %977 = vmatprep.subr.mxu0 0.0
    %978 = vmatpush1.msra.mxu0 0.0
    %979 = vmatprep.subr.mxu0 0.0
    %980 = vmatpush1.msra.mxu0 0.0
    %981 = vmatprep.subr.mxu0 0.0
    %982 = vmatpush1.msra.mxu0 0.0
    %983 = vmatprep.subr.mxu0 0.0
    %984 = vmatpush1.msra.mxu0 0.0
    %985 = vmatprep.subr.mxu0 0.0
    %986 = vmatpush1.msra.mxu0 0.0
    %987 = vmatprep.subr.mxu0 0.0
    %988 = vmatpush1.msra.mxu0 0.0
    %989 = vmatprep.subr.mxu0 0.0
    %990 = vmatpush1.msra.mxu0 0.0
    %991 = vmatprep.subr.mxu0 0.0
    %992 = vmatpush1.msra.mxu0 0.0
    %993 = vmatprep.subr.mxu0 0.0
    %994 = vmatpush1.msra.mxu0 0.0
    %995 = vmatprep.subr.mxu0 0.0
    %996 = vmatpush1.msra.mxu0 0.0
    %997 = vmatprep.subr.mxu0 0.0
    %998 = vmatpush1.msra.mxu0 0.0
    %999 = vmatprep.subr.mxu0 0.0
    %1000 = vmatpush1.msra.mxu0 0.0
    %1001 = vmatprep.subr.mxu0 0.0
    %1002 = vmatpush1.msra.mxu0 0.0
    %1003 = vmatprep.subr.mxu0 0.0
    %1004 = vmatpush1.msra.mxu0 0.0
    %1005 = vmatprep.mubr.f32.mxu0 0.0
    %1006 = vmatmul.mubr.f32.gmra.mrb[0].mxu0 %v773
    %v1007 = vpop.f32.mrb[0].mxu0
    %v1008 = vadd.f32 %v939, %v1007
    %v1009 = vpop.f32.mrb[0].mxu0
    %1010 = vdwg.mxu0
    %v1012 = vsel %vm425, %v842, 0
    %v1015 = vsel %vm425, %v925, 0
    %1017 = vmatprep.subr.mxu0 0.0
    %1018 = vmatpush1.xpose.msra.mxu0 %v1015
    %1019 = vmatprep.subr.mxu0 0.0
    %1020 = vmatpush1.xpose.msra.mxu0 0.0
    %1021 = vmatprep.subr.mxu0 0.0
    %1022 = vmatpush1.xpose.msra.mxu0 0.0
    %1023 = vmatprep.subr.mxu0 0.0
    %1024 = vmatpush1.xpose.msra.mxu0 0.0
    %1025 = vmatprep.subr.mxu0 0.0
    %1026 = vmatpush1.xpose.msra.mxu0 0.0
    %1027 = vmatprep.subr.mxu0 0.0
    %1028 = vmatpush1.xpose.msra.mxu0 0.0
    %1029 = vmatprep.subr.mxu0 0.0
    %1030 = vmatpush1.xpose.msra.mxu0 0.0
    %1031 = vmatprep.subr.mxu0 0.0
    %1032 = vmatpush1.xpose.msra.mxu0 0.0
    %1033 = vmatprep.subr.mxu0 0.0
    %1034 = vmatpush1.xpose.msra.mxu0 0.0
    %1035 = vmatprep.subr.mxu0 0.0
    %1036 = vmatpush1.xpose.msra.mxu0 0.0
    %1037 = vmatprep.subr.mxu0 0.0
    %1038 = vmatpush1.xpose.msra.mxu0 0.0
    %1039 = vmatprep.subr.mxu0 0.0
    %1040 = vmatpush1.xpose.msra.mxu0 0.0
    %1041 = vmatprep.subr.mxu0 0.0
    %1042 = vmatpush1.xpose.msra.mxu0 0.0
    %1043 = vmatprep.subr.mxu0 0.0
    %1044 = vmatpush1.xpose.msra.mxu0 0.0
    %1045 = vmatprep.subr.mxu0 0.0
    %1046 = vmatpush1.xpose.msra.mxu0 0.0
    %1047 = vmatprep.subr.mxu0 0.0
    %1048 = vmatpush1.xpose.msra.mxu0 0.0
    %1049 = vmatprep.subr.mxu0 0.0
    %1050 = vmatpush1.xpose.msra.mxu0 0.0
    %1051 = vmatprep.subr.mxu0 0.0
    %1052 = vmatpush1.xpose.msra.mxu0 0.0
    %1053 = vmatprep.subr.mxu0 0.0
    %1054 = vmatpush1.xpose.msra.mxu0 0.0
    %1055 = vmatprep.subr.mxu0 0.0
    %1056 = vmatpush1.xpose.msra.mxu0 0.0
    %1057 = vmatprep.subr.mxu0 0.0
    %1058 = vmatpush1.xpose.msra.mxu0 0.0
    %1059 = vmatprep.subr.mxu0 0.0
    %1060 = vmatpush1.xpose.msra.mxu0 0.0
    %1061 = vmatprep.subr.mxu0 0.0
    %1062 = vmatpush1.xpose.msra.mxu0 0.0
    %1063 = vmatprep.subr.mxu0 0.0
    %1064 = vmatpush1.xpose.msra.mxu0 0.0
    %1065 = vmatprep.subr.mxu0 0.0
    %1066 = vmatpush1.xpose.msra.mxu0 0.0
    %1067 = vmatprep.subr.mxu0 0.0
    %1068 = vmatpush1.xpose.msra.mxu0 0.0
    %1069 = vmatprep.subr.mxu0 0.0
    %1070 = vmatpush1.xpose.msra.mxu0 0.0
    %1071 = vmatprep.subr.mxu0 0.0
    %1072 = vmatpush1.xpose.msra.mxu0 0.0
    %1073 = vmatprep.subr.mxu0 0.0
    %1074 = vmatpush1.xpose.msra.mxu0 0.0
    %1075 = vmatprep.subr.mxu0 0.0
    %1076 = vmatpush1.xpose.msra.mxu0 0.0
    %1077 = vmatprep.subr.mxu0 0.0
    %1078 = vmatpush1.xpose.msra.mxu0 0.0
    %1079 = vmatprep.subr.mxu0 0.0
    %1080 = vmatpush1.xpose.msra.mxu0 0.0
    %1081 = vmatprep.mubr.f32.mxu0 0.0
    %1082 = vmatmul.mubr.f32.gmra.mrb[0].mxu0 %v1012
    %v1083 = vpop.f32.mrb[0].mxu0
    %v1084 = vadd.f32 0.0, %v1083
    %v1085 = vpop.f32.mrb[0].mxu0
    %1086 = vdwg.mxu0
    %v1087 = vsel %vm502, %v1084, -inf
    %1088 = vmax.xlane.f32.xlu0 %v1087
    %v1089 = vpop.xlane.xlu0 %1088
    %v1090 = vsub.f32 %v1084, %v1089
    %v1091 = vmul.f32 %v1090, 1.442695
    %v1092 = vpow.pop %v1091
    %v1093 = vsel %vm502, %v1092, 0.0
    %1094 = vadd.xlane.f32.xlu0 %v1093
    %v1095 = vpop.xlane.xlu0 %1094
    %v1096 = vrcp.pop %v1095
    %v1097 = vmul.f32 %v1092, %v1096
    %v1098 = vsel %vm502, %v1097, 0.0
    %s1099 = scalar_lea.vmem [#allocation9], 8
    %1100 = vst [vmem:[%s1099] sm:$0xff] %v1098
    %v1102 = vsel %vm502, %v1097, 0
    %1104 = vmatprep.subr.mxu0 0.0
    %1105 = vmatpush1.msra.mxu0 %v1008
    %1106 = vmatprep.subr.mxu0 0.0
    %1107 = vmatpush1.msra.mxu0 0.0
    %1108 = vmatprep.subr.mxu0 0.0
    %1109 = vmatpush1.msra.mxu0 0.0
    %1110 = vmatprep.subr.mxu0 0.0
    %1111 = vmatpush1.msra.mxu0 0.0
    %1112 = vmatprep.subr.mxu0 0.0
    %1113 = vmatpush1.msra.mxu0 0.0
    %1114 = vmatprep.subr.mxu0 0.0
    %1115 = vmatpush1.msra.mxu0 0.0
    %1116 = vmatprep.subr.mxu0 0.0
    %1117 = vmatpush1.msra.mxu0 0.0
    %1118 = vmatprep.subr.mxu0 0.0
    %1119 = vmatpush1.msra.mxu0 0.0
    %1120 = vmatprep.subr.mxu0 0.0
    %1121 = vmatpush1.msra.mxu0 0.0
    %1122 = vmatprep.subr.mxu0 0.0
    %1123 = vmatpush1.msra.mxu0 0.0
    %1124 = vmatprep.subr.mxu0 0.0
    %1125 = vmatpush1.msra.mxu0 0.0
    %1126 = vmatprep.subr.mxu0 0.0
    %1127 = vmatpush1.msra.mxu0 0.0
    %1128 = vmatprep.subr.mxu0 0.0
    %1129 = vmatpush1.msra.mxu0 0.0
    %1130 = vmatprep.subr.mxu0 0.0
    %1131 = vmatpush1.msra.mxu0 0.0
    %1132 = vmatprep.subr.mxu0 0.0
    %1133 = vmatpush1.msra.mxu0 0.0
    %1134 = vmatprep.subr.mxu0 0.0
    %1135 = vmatpush1.msra.mxu0 0.0
    %1136 = vmatprep.subr.mxu0 0.0
    %1137 = vmatpush1.msra.mxu0 0.0
    %1138 = vmatprep.subr.mxu0 0.0
    %1139 = vmatpush1.msra.mxu0 0.0
    %1140 = vmatprep.subr.mxu0 0.0
    %1141 = vmatpush1.msra.mxu0 0.0
    %1142 = vmatprep.subr.mxu0 0.0
    %1143 = vmatpush1.msra.mxu0 0.0
    %1144 = vmatprep.subr.mxu0 0.0
    %1145 = vmatpush1.msra.mxu0 0.0
    %1146 = vmatprep.subr.mxu0 0.0
    %1147 = vmatpush1.msra.mxu0 0.0
    %1148 = vmatprep.subr.mxu0 0.0
    %1149 = vmatpush1.msra.mxu0 0.0
    %1150 = vmatprep.subr.mxu0 0.0
    %1151 = vmatpush1.msra.mxu0 0.0
    %1152 = vmatprep.subr.mxu0 0.0
    %1153 = vmatpush1.msra.mxu0 0.0
    %1154 = vmatprep.subr.mxu0 0.0
    %1155 = vmatpush1.msra.mxu0 0.0
    %1156 = vmatprep.subr.mxu0 0.0
    %1157 = vmatpush1.msra.mxu0 0.0
    %1158 = vmatprep.subr.mxu0 0.0
    %1159 = vmatpush1.msra.mxu0 0.0
    %1160 = vmatprep.subr.mxu0 0.0
    %1161 = vmatpush1.msra.mxu0 0.0
    %1162 = vmatprep.subr.mxu0 0.0
    %1163 = vmatpush1.msra.mxu0 0.0
    %1164 = vmatprep.subr.mxu0 0.0
    %1165 = vmatpush1.msra.mxu0 0.0
    %1166 = vmatprep.subr.mxu0 0.0
    %1167 = vmatpush1.msra.mxu0 0.0
    %1168 = vmatprep.mubr.f32.mxu0 0.0
    %1169 = vmatmul.mubr.f32.gmra.mrb[0].mxu0 %v1102
    %v1170 = vpop.f32.mrb[0].mxu0
    %v1171 = vadd.f32 %v758, %v1170
    %v1172 = vpop.f32.mrb[0].mxu0
    %1173 = vdwg.mxu0
    %s1174 = scalar_lea.vmem %s8, 32
    %v1175 = vld [vmem:[%s1174] sm:$0xff]
    %v1176 = vld [vmem:[%s1174 + $0x8] sm:$0xff]
    %v1177 = vld [vmem:[%s1174 + $0x10] sm:$0xff]
    %v1178 = vld [vmem:[%s1174 + $0x18] sm:$0xff]
    %s1179 = scalar_lea.vmem %s9, 1
    %v1180 = vld [vmem:[%s1179] sm:$0x1]
    %v1182 = vlaneseq
    %v1183 = vshrl.u32 %v1182, 7
    %v1184 = vsub.s32 0, %v1183
    %v1185 = vrot.slane %v1180, %v1184
    %v1188 = vsel %vm105, %v1171, 0
    %1190 = vmatprep.subr.mxu0 0.0
    %1191 = vmatpush1.msra.mxu0 %v1175
    %1192 = vmatprep.subr.mxu0 0.0
    %1193 = vmatpush1.msra.mxu0 %v1176
    %1194 = vmatprep.subr.mxu0 0.0
    %1195 = vmatpush1.msra.mxu0 %v1177
    %1196 = vmatprep.subr.mxu0 0.0
    %1197 = vmatpush1.msra.mxu0 %v1178
    %1198 = vmatprep.subr.mxu0 0.0
    %1199 = vmatpush1.msra.mxu0 0.0
    %1200 = vmatprep.subr.mxu0 0.0
    %1201 = vmatpush1.msra.mxu0 0.0
    %1202 = vmatprep.subr.mxu0 0.0
    %1203 = vmatpush1.msra.mxu0 0.0
    %1204 = vmatprep.subr.mxu0 0.0
    %1205 = vmatpush1.msra.mxu0 0.0
    %1206 = vmatprep.subr.mxu0 0.0
    %1207 = vmatpush1.msra.mxu0 0.0
    %1208 = vmatprep.subr.mxu0 0.0
    %1209 = vmatpush1.msra.mxu0 0.0
    %1210 = vmatprep.subr.mxu0 0.0
    %1211 = vmatpush1.msra.mxu0 0.0
    %1212 = vmatprep.subr.mxu0 0.0
    %1213 = vmatpush1.msra.mxu0 0.0
    %1214 = vmatprep.subr.mxu0 0.0
    %1215 = vmatpush1.msra.mxu0 0.0
    %1216 = vmatprep.subr.mxu0 0.0
    %1217 = vmatpush1.msra.mxu0 0.0
    %1218 = vmatprep.subr.mxu0 0.0
    %1219 = vmatpush1.msra.mxu0 0.0
    %1220 = vmatprep.subr.mxu0 0.0
    %1221 = vmatpush1.msra.mxu0 0.0
    %1222 = vmatprep.subr.mxu0 0.0
    %1223 = vmatpush1.msra.mxu0 0.0
    %1224 = vmatprep.subr.mxu0 0.0
    %1225 = vmatpush1.msra.mxu0 0.0
    %1226 = vmatprep.subr.mxu0 0.0
    %1227 = vmatpush1.msra.mxu0 0.0
    %1228 = vmatprep.subr.mxu0 0.0
    %1229 = vmatpush1.msra.mxu0 0.0
    %1230 = vmatprep.subr.mxu0 0.0
    %1231 = vmatpush1.msra.mxu0 0.0
    %1232 = vmatprep.subr.mxu0 0.0
    %1233 = vmatpush1.msra.mxu0 0.0
    %1234 = vmatprep.subr.mxu0 0.0
    %1235 = vmatpush1.msra.mxu0 0.0
    %1236 = vmatprep.subr.mxu0 0.0
    %1237 = vmatpush1.msra.mxu0 0.0
    %1238 = vmatprep.subr.mxu0 0.0
    %1239 = vmatpush1.msra.mxu0 0.0
    %1240 = vmatprep.subr.mxu0 0.0
    %1241 = vmatpush1.msra.mxu0 0.0
    %1242 = vmatprep.subr.mxu0 0.0
    %1243 = vmatpush1.msra.mxu0 0.0
    %1244 = vmatprep.subr.mxu0 0.0
    %1245 = vmatpush1.msra.mxu0 0.0
    %1246 = vmatprep.subr.mxu0 0.0
    %1247 = vmatpush1.msra.mxu0 0.0
    %1248 = vmatprep.subr.mxu0 0.0
    %1249 = vmatpush1.msra.mxu0 0.0
    %1250 = vmatprep.subr.mxu0 0.0
    %1251 = vmatpush1.msra.mxu0 0.0
    %1252 = vmatprep.subr.mxu0 0.0
    %1253 = vmatpush1.msra.mxu0 0.0
    %1254 = vmatprep.mubr.f32.mxu0 0.0
    %1255 = vmatmul.mubr.f32.gmra.mrb[0].mxu0 %v1188
    %v1256 = vpop.f32.mrb[0].mxu0
    %v1257 = vadd.f32 %v1185, %v1256
    %v1258 = vpop.f32.mrb[0].mxu0
    %1259 = vdwg.mxu0
    %v1260 = vmax.f32 %v1257, 0.0
    %s1261 = scalar_lea.vmem %s10, 32
    %v1262 = vld [vmem:[%s1261] sm:$0xff]
    %v1263 = vld [vmem:[%s1261 + $0x8] sm:$0xff]
    %v1264 = vld [vmem:[%s1261 + $0x10] sm:$0xff]
    %v1265 = vld [vmem:[%s1261 + $0x18] sm:$0xff]
    %s1266 = scalar_lea.vmem %s11, 1
    %v1267 = vld [vmem:[%s1266] sm:$0x1]
    %v1269 = vlaneseq
    %v1270 = vshrl.u32 %v1269, 7
    %v1271 = vsub.s32 0, %v1270
    %v1272 = vrot.slane %v1267, %v1271
    %v1275 = vsel %vm105, %v1260, 0
    %1277 = vmatprep.subr.mxu0 0.0
    %1278 = vmatpush1.msra.mxu0 %v1262
    %1279 = vmatprep.subr.mxu0 0.0
    %1280 = vmatpush1.msra.mxu0 %v1263
    %1281 = vmatprep.subr.mxu0 0.0
    %1282 = vmatpush1.msra.mxu0 %v1264
    %1283 = vmatprep.subr.mxu0 0.0
    %1284 = vmatpush1.msra.mxu0 %v1265
    %1285 = vmatprep.subr.mxu0 0.0
    %1286 = vmatpush1.msra.mxu0 0.0
    %1287 = vmatprep.subr.mxu0 0.0
    %1288 = vmatpush1.msra.mxu0 0.0
    %1289 = vmatprep.subr.mxu0 0.0
    %1290 = vmatpush1.msra.mxu0 0.0
    %1291 = vmatprep.subr.mxu0 0.0
    %1292 = vmatpush1.msra.mxu0 0.0
    %1293 = vmatprep.subr.mxu0 0.0
    %1294 = vmatpush1.msra.mxu0 0.0
    %1295 = vmatprep.subr.mxu0 0.0
    %1296 = vmatpush1.msra.mxu0 0.0
    %1297 = vmatprep.subr.mxu0 0.0
    %1298 = vmatpush1.msra.mxu0 0.0
    %1299 = vmatprep.subr.mxu0 0.0
    %1300 = vmatpush1.msra.mxu0 0.0
    %1301 = vmatprep.subr.mxu0 0.0
    %1302 = vmatpush1.msra.mxu0 0.0
    %1303 = vmatprep.subr.mxu0 0.0
    %1304 = vmatpush1.msra.mxu0 0.0
    %1305 = vmatprep.subr.mxu0 0.0
    %1306 = vmatpush1.msra.mxu0 0.0
    %1307 = vmatprep.subr.mxu0 0.0
    %1308 = vmatpush1.msra.mxu0 0.0
    %1309 = vmatprep.subr.mxu0 0.0
    %1310 = vmatpush1.msra.mxu0 0.0
    %1311 = vmatprep.subr.mxu0 0.0
    %1312 = vmatpush1.msra.mxu0 0.0
    %1313 = vmatprep.subr.mxu0 0.0
    %1314 = vmatpush1.msra.mxu0 0.0
    %1315 = vmatprep.subr.mxu0 0.0
    %1316 = vmatpush1.msra.mxu0 0.0
    %1317 = vmatprep.subr.mxu0 0.0
    %1318 = vmatpush1.msra.mxu0 0.0
    %1319 = vmatprep.subr.mxu0 0.0
    %1320 = vmatpush1.msra.mxu0 0.0
    %1321 = vmatprep.subr.mxu0 0.0
    %1322 = vmatpush1.msra.mxu0 0.0
    %1323 = vmatprep.subr.mxu0 0.0
    %1324 = vmatpush1.msra.mxu0 0.0
    %1325 = vmatprep.subr.mxu0 0.0
    %1326 = vmatpush1.msra.mxu0 0.0
    %1327 = vmatprep.subr.mxu0 0.0
    %1328 = vmatpush1.msra.mxu0 0.0
    %1329 = vmatprep.subr.mxu0 0.0
    %1330 = vmatpush1.msra.mxu0 0.0
    %1331 = vmatprep.subr.mxu0 0.0
    %1332 = vmatpush1.msra.mxu0 0.0
    %1333 = vmatprep.subr.mxu0 0.0
    %1334 = vmatpush1.msra.mxu0 0.0
    %1335 = vmatprep.subr.mxu0 0.0
    %1336 = vmatpush1.msra.mxu0 0.0
    %1337 = vmatprep.subr.mxu0 0.0
    %1338 = vmatpush1.msra.mxu0 0.0
    %1339 = vmatprep.subr.mxu0 0.0
    %1340 = vmatpush1.msra.mxu0 0.0
    %1341 = vmatprep.mubr.f32.mxu0 0.0
    %1342 = vmatmul.mubr.f32.gmra.mrb[0].mxu0 %v1275
    %v1343 = vpop.f32.mrb[0].mxu0
    %v1344 = vadd.f32 %v1272, %v1343
    %v1345 = vpop.f32.mrb[0].mxu0
    %1346 = vdwg.mxu0
    %v1347 = vadd.f32 %v1344, %v1171
    %v1348 = vld [vmem:[%s12] sm:$0xff]
    %v1349 = vld [vmem:[%s12 + $0x8] sm:$0xff]
    %v1350 = vld [vmem:[%s12 + $0x10] sm:$0xff]
    %v1351 = vld [vmem:[%s12 + $0x18] sm:$0xff]
    %v1352 = vld [vmem:[%s13] sm:$0x1]
    %v1354 = vlaneseq
    %v1355 = vshrl.u32 %v1354, 7
    %v1356 = vsub.s32 0, %v1355
    %v1357 = vrot.slane %v1352, %v1356
    %v1360 = vsel %vm105, %v1347, 0
    %1362 = vmatprep.subr.mxu0 0.0
    %1363 = vmatpush1.msra.mxu0 %v1348
    %1364 = vmatprep.subr.mxu0 0.0
    %1365 = vmatpush1.msra.mxu0 %v1349
    %1366 = vmatprep.subr.mxu0 0.0
    %1367 = vmatpush1.msra.mxu0 %v1350
    %1368 = vmatprep.subr.mxu0 0.0
    %1369 = vmatpush1.msra.mxu0 %v1351
    %1370 = vmatprep.subr.mxu0 0.0
    %1371 = vmatpush1.msra.mxu0 0.0
    %1372 = vmatprep.subr.mxu0 0.0
    %1373 = vmatpush1.msra.mxu0 0.0
    %1374 = vmatprep.subr.mxu0 0.0
    %1375 = vmatpush1.msra.mxu0 0.0
    %1376 = vmatprep.subr.mxu0 0.0
    %1377 = vmatpush1.msra.mxu0 0.0
    %1378 = vmatprep.subr.mxu0 0.0
    %1379 = vmatpush1.msra.mxu0 0.0
    %1380 = vmatprep.subr.mxu0 0.0
    %1381 = vmatpush1.msra.mxu0 0.0
    %1382 = vmatprep.subr.mxu0 0.0
    %1383 = vmatpush1.msra.mxu0 0.0
    %1384 = vmatprep.subr.mxu0 0.0
    %1385 = vmatpush1.msra.mxu0 0.0
    %1386 = vmatprep.subr.mxu0 0.0
    %1387 = vmatpush1.msra.mxu0 0.0
    %1388 = vmatprep.subr.mxu0 0.0
    %1389 = vmatpush1.msra.mxu0 0.0
    %1390 = vmatprep.subr.mxu0 0.0
    %1391 = vmatpush1.msra.mxu0 0.0
    %1392 = vmatprep.subr.mxu0 0.0
    %1393 = vmatpush1.msra.mxu0 0.0
    %1394 = vmatprep.subr.mxu0 0.0
    %1395 = vmatpush1.msra.mxu0 0.0
    %1396 = vmatprep.subr.mxu0 0.0
    %1397 = vmatpush1.msra.mxu0 0.0
    %1398 = vmatprep.subr.mxu0 0.0
    %1399 = vmatpush1.msra.mxu0 0.0
    %1400 = vmatprep.subr.mxu0 0.0
    %1401 = vmatpush1.msra.mxu0 0.0
    %1402 = vmatprep.subr.mxu0 0.0
    %1403 = vmatpush1.msra.mxu0 0.0
    %1404 = vmatprep.subr.mxu0 0.0
    %1405 = vmatpush1.msra.mxu0 0.0
    %1406 = vmatprep.subr.mxu0 0.0
    %1407 = vmatpush1.msra.mxu0 0.0
    %1408 = vmatprep.subr.mxu0 0.0
    %1409 = vmatpush1.msra.mxu0 0.0
    %1410 = vmatprep.subr.mxu0 0.0
    %1411 = vmatpush1.msra.mxu0 0.0
    %1412 = vmatprep.subr.mxu0 0.0
    %1413 = vmatpush1.msra.mxu0 0.0
    %1414 = vmatprep.subr.mxu0 0.0
    %1415 = vmatpush1.msra.mxu0 0.0
    %1416 = vmatprep.subr.mxu0 0.0
    %1417 = vmatpush1.msra.mxu0 0.0
    %1418 = vmatprep.subr.mxu0 0.0
    %1419 = vmatpush1.msra.mxu0 0.0
    %1420 = vmatprep.subr.mxu0 0.0
    %1421 = vmatpush1.msra.mxu0 0.0
    %1422 = vmatprep.subr.mxu0 0.0
    %1423 = vmatpush1.msra.mxu0 0.0
    %1424 = vmatprep.subr.mxu0 0.0
    %1425 = vmatpush1.msra.mxu0 0.0
    %1426 = vmatprep.mubr.f32.mxu0 0.0
    %1427 = vmatmul.mubr.f32.gmra.mrb[0].mxu0 %v1360
    %v1428 = vpop.f32.mrb[0].mxu0
    %v1429 = vadd.f32 %v1357, %v1428
    %v1430 = vpop.f32.mrb[0].mxu0
    %1431 = vdwg.mxu0
    %1432 = vmax.xlane.f32.xlu0 %v1429
    %v1433 = vpop.xlane.xlu0 %1432
    %v1434 = vsub.f32 %v1429, %v1433
    %v1435 = vmul.f32 %v1434, 1.442695
    %v1436 = vpow.pop %v1435
    %1437 = vadd.xlane.f32.xlu0 %v1436
    %v1438 = vpop.xlane.xlu0 %1437
    %v1439 = vrcp.pop %v1438
    %v1440 = vmul.f32 %v1436, %v1439
    %1441 = vst [vmem:[#allocation8] sm:$0xff] %v1440
    // Predicated region
    $region70: #{tpu_custom_call.1} parent=1 // pred_check
      _
    $region71: #{tpu_custom_call.1} parent=1 // pred_check_branch
      %1443 = sbr.rel (0) target = $region73
    $region72: #{tpu_custom_call.1} parent=1 // pred_region
      %s1445 = ssub.s32 128, 128
      %1446 = vsyncadd [#allocation4], %s1445
      %s1448 = sshll.u32 [#allocation8], 4
      %s1449 = int_to_ptr.vmem [resolvable:$true] %s1448
      %1451 = dma.vmem_to_hbm [thread:$0]  %s1449, 128, %s14, [#allocation4]
    $region73: #{tpu_custom_call.1} parent=1 // pred_fallthru
      _
    // Predicated region
    $region74: #{tpu_custom_call.1} parent=1 // pred_check
      _
    $region75: #{tpu_custom_call.1} parent=1 // pred_check_branch
      %1453 = sbr.rel (0) target = $region77
    $region76: #{tpu_custom_call.1} parent=1 // pred_region
      %s1455 = ssub.s32 256, 256
      %1456 = vsyncadd [#allocation10], %s1455
      %s1457 = sshll.u32 [#allocation9], 4
      %s1458 = int_to_ptr.vmem [resolvable:$true] %s1457
      %1463 = dma.vmem_to_hbm [thread:$0]  %s1458, 256, %s15, [#allocation10], 128, 128, 8
    $region77: #{tpu_custom_call.1} parent=1 // pred_fallthru
      _
    // Predicated region
    $region78: #{tpu_custom_call.1} parent=1 // pred_check
      _
    $region79: #{tpu_custom_call.1} parent=1 // pred_check_branch
      %1465 = sbr.rel (0) target = $region81
    $region80: #{tpu_custom_call.1} parent=1 // pred_region
      %1466 = dma.done [#allocation4], 128
    $region81: #{tpu_custom_call.1} parent=1 // pred_fallthru
      _
    // Predicated region
    $region82: #{tpu_custom_call.1} parent=1 // pred_check
      _
    $region83: #{tpu_custom_call.1} parent=1 // pred_check_branch
      %1468 = sbr.rel (0) target = $region85
    $region84: #{tpu_custom_call.1} parent=1 // pred_region
      %1469 = dma.done [#allocation10], 256
    $region85: #{tpu_custom_call.1} parent=1 // pred_fallthru
      _
    %1470 = vsyncpa [#allocation3], 1
    %1471 = vsyncpa [#allocation6], 1
    %1472 = vsyncpa [#allocation4], 1
    %1473 = vsyncpa [#allocation10], 1

</llo_original>
